<compile_context>
chip_gen: v7x
topology: tpu7x:2x2x1
jax: 0.10.0
libtpu: 0.0.40
codegen_flags: <defaults>
</compile_context>

<pallas_src>
import functools

import jax
import jax.numpy as jnp
from jax.experimental import pallas as pl
from jax.experimental.pallas import tpu as pltpu


def _round_up(x, m):
    return (x + m - 1) // m * m


def _tpu_config():
    """Per-generation tiling / VMEM-limit selection (v5e/v6e: 128 MiB, v7x: 64 MiB)."""
    vmem_phys = None
    try:
        info = pltpu.get_tpu_info()
        vmem_phys = getattr(info, "vmem_capacity_bytes", None)
    except Exception:
        vmem_phys = None
    if vmem_phys is not None and vmem_phys >= 100 * 1024 * 1024:
        # v5e / v6e: plenty of VMEM -> bigger M tiles, fewer grid steps.
        return {"tm_max": 1024, "tn_max": 1024, "vmem_limit": 96 * 1024 * 1024}
    # v7x (64 MiB VMEM) or unknown: stay conservative.
    return {"tm_max": 512, "tn_max": 1024, "vmem_limit": 48 * 1024 * 1024}


# --------------------------------------------------------------------------
# Fused Conv2d (valid, stride 1) + bias + ReLU + HAT gate + 2x2 max-pool.
# One image per grid step; the image is a flat (H*W, Cin) row-major view.
# --------------------------------------------------------------------------
def _conv_pool_kernel(x_ref, w_ref, b_ref, g_ref, o_ref, y_sc, pool_sc, *, H, W, k):
    Ho, Wo = H - k + 1, W - k + 1
    Hp, Wp = Ho // 2, Wo // 2
    # Flat rows covering every valid conv output position (i < Ho, j < Wo):
    # conv(i, j) lives at flat row i*W + j.  Rows with j >= Wo hold garbage
    # (they wrap into the next image row) but are never read by the pooling.
    M = (Ho - 1) * W + Wo

    acc = None
    for di in range(k):
        for dj in range(k):
            s = di * W + dj
            tap = x_ref[0, s:s + M, :]                    # (M, Cin) bf16
            contrib = jax.lax.dot_general(
                tap, w_ref[di * k + dj],                  # (Cin, Cout) bf16
                (((1,), (0,)), ((), ())),
                preferred_element_type=jnp.float32)
            acc = contrib if acc is None else acc + contrib

    # bias + ReLU + HAT gate (gate > 0 => commutes with the max-pool below).
    y_sc[...] = jnp.maximum(acc + b_ref[...], 0.0) * g_ref[...]

    # 2x2 max-pool (floor): H-pairs first, then W-pairs via strided reads.
    for p in range(Hp):
        r0 = y_sc[2 * p * W:2 * p * W + 2 * Wp, :]
        r1 = y_sc[(2 * p + 1) * W:(2 * p + 1) * W + 2 * Wp, :]
        pool_sc[p * 2 * Wp:(p + 1) * 2 * Wp, :] = jnp.maximum(r0, r1)

    even = pool_sc[pl.ds(0, Hp * Wp, stride=2), :]
    odd = pool_sc[pl.ds(1, Hp * Wp, stride=2), :]
    o_ref[0] = jnp.maximum(even, odd).astype(o_ref.dtype)


def conv_pool_gate(h_flat, H, W, k, w_taps, b, gate, cfg, out_dtype=jnp.bfloat16):
    """h_flat: (B, H*W, Cin) bf16; w_taps: (k*k, Cin, Cout) bf16 -> (B, Hp*Wp, Cout)."""
    B = h_flat.shape[0]
    kk, Cin, Cout = w_taps.shape
    assert kk == k * k
    Ho, Wo = H - k + 1, W - k + 1
    Hp, Wp = Ho // 2, Wo // 2
    M = (Ho - 1) * W + Wo

    b2 = b.reshape(1, Cout).astype(jnp.float32)
    g2 = gate.reshape(1, Cout).astype(jnp.float32)

    kernel = functools.partial(_conv_pool_kernel, H=H, W=W, k=k)
    flops = 2 * B * M * kk * Cin * Cout
    bytes_accessed = 2 * (h_flat.size + w_taps.size + B * Hp * Wp * Cout)

    out = pl.pallas_call(
        kernel,
        out_shape=jax.ShapeDtypeStruct((B, Hp * Wp, Cout), out_dtype),
        grid=(B,),
        in_specs=[
            pl.BlockSpec((1, H * W, Cin), lambda bi: (bi, 0, 0)),
            pl.BlockSpec((kk, Cin, Cout), lambda bi: (0, 0, 0)),
            pl.BlockSpec((1, Cout), lambda bi: (0, 0)),
            pl.BlockSpec((1, Cout), lambda bi: (0, 0)),
        ],
        out_specs=pl.BlockSpec((1, Hp * Wp, Cout), lambda bi: (bi, 0, 0)),
        scratch_shapes=[
            pltpu.VMEM((M, Cout), jnp.float32),
            pltpu.VMEM((2 * Hp * Wp, Cout), jnp.float32),
        ],
        compiler_params=pltpu.CompilerParams(
            dimension_semantics=("parallel",),
            vmem_limit_bytes=cfg["vmem_limit"]),
        cost_estimate=pl.CostEstimate(flops=flops, transcendentals=0,
                                      bytes_accessed=bytes_accessed),
    )(h_flat.astype(jnp.bfloat16), w_taps, b2, g2)
    return out, Hp, Wp


# --------------------------------------------------------------------------
# Fused linear:  y = [relu](x @ w + b) [* gate]
# --------------------------------------------------------------------------
def _mm_bias_act_kernel(x_ref, w_ref, b_ref, o_ref, *, relu):
    acc = jax.lax.dot_general(x_ref[...], w_ref[...], (((1,), (0,)), ((), ())),
                              preferred_element_type=jnp.float32)
    acc = acc + b_ref[...]
    if relu:
        acc = jnp.maximum(acc, 0.0)
    o_ref[...] = acc.astype(o_ref.dtype)


def _mm_bias_act_gate_kernel(x_ref, w_ref, b_ref, g_ref, o_ref, *, relu):
    acc = jax.lax.dot_general(x_ref[...], w_ref[...], (((1,), (0,)), ((), ())),
                              preferred_element_type=jnp.float32)
    acc = acc + b_ref[...]
    if relu:
        acc = jnp.maximum(acc, 0.0)
    o_ref[...] = (acc * g_ref[...]).astype(o_ref.dtype)


def pallas_linear(x, w_kn, b, gate=None, relu=False, out_dtype=jnp.bfloat16, cfg=None):
    """x:(M,K), w_kn:(K,N) [bf16], b:(N,), gate:(N,) or None -> (M,N)."""
    if cfg is None:
        cfg = _tpu_config()
    M, K = x.shape
    Kw, N = w_kn.shape
    assert K == Kw, (K, Kw)
    tm_max, tn_max = cfg["tm_max"], cfg["tn_max"]

    x = x.astype(jnp.bfloat16)
    w_kn = w_kn.astype(jnp.bfloat16)
    b2 = b.reshape(1, N).astype(jnp.float32)

    # Output-feature (lane) tiling.
    if N % 128 == 0:
        tn = min(tn_max, N)
        while N % tn:
            tn //= 2
    else:
        tn = N

    # Row (sublane) tiling: tile + zero-pad only when M is large so the small
    # layers stay single-tile and the padding copy is avoided entirely.
    if M > tm_max:
        tm = tm_max
        Mp = _round_up(M, tm)
        if Mp != M:
            x = jnp.pad(x, ((0, Mp - M), (0, 0)))
    else:
        tm, Mp = M, M

    grid = (Mp // tm, N // tn)

    in_specs = [
        pl.BlockSpec((tm, K), lambda i, j: (i, 0)),
        pl.BlockSpec((K, tn), lambda i, j: (0, j)),
        pl.BlockSpec((1, tn), lambda i, j: (0, j)),
    ]
    args = [x, w_kn, b2]
    if gate is None:
        kernel = functools.partial(_mm_bias_act_kernel, relu=relu)
    else:
        kernel = functools.partial(_mm_bias_act_gate_kernel, relu=relu)
        in_specs.append(pl.BlockSpec((1, tn), lambda i, j: (0, j)))
        args.append(gate.reshape(1, N).astype(jnp.float32))

    out_bytes = 2 if out_dtype == jnp.bfloat16 else 4
    cost = pl.CostEstimate(
        flops=2 * Mp * N * K, transcendentals=0,
        bytes_accessed=Mp * K * 2 + K * N * 2 + Mp * N * out_bytes)

    out = pl.pallas_call(
        kernel,
        out_shape=jax.ShapeDtypeStruct((Mp, N), out_dtype),
        grid=grid,
        in_specs=in_specs,
        out_specs=pl.BlockSpec((tm, tn), lambda i, j: (i, j)),
        compiler_params=pltpu.CompilerParams(
            dimension_semantics=("parallel", "parallel"),
            vmem_limit_bytes=cfg["vmem_limit"]),
        cost_estimate=cost,
    )(*args)

    if Mp != M:
        out = out[:M]
    return out


# --------------------------------------------------------------------------
# Parameter construction (PyTorch layout, deterministic, synthetic)
# --------------------------------------------------------------------------
def conv_out_size(size, k):
    return size - k + 1


def init_params(key, ncha, size, taskcla):
    k1, k2, k3 = size // 8, size // 10, 2
    s = conv_out_size(size, k1) // 2
    s = conv_out_size(s, k2) // 2
    s = conv_out_size(s, k3) // 2
    smid = s
    ntasks = len(taskcla)

    keys = jax.random.split(key, 16)

    def w_init(k, shape, fan_in):
        return jax.random.normal(k, shape, jnp.float32) / jnp.sqrt(fan_in)

    params = {
        "smid": smid,
        "c1_w": w_init(keys[0], (64, ncha, k1, k1), ncha * k1 * k1),
        "c1_b": jnp.zeros((64,), jnp.float32),
        "c2_w": w_init(keys[1], (128, 64, k2, k2), 64 * k2 * k2),
        "c2_b": jnp.zeros((128,), jnp.float32),
        "c3_w": w_init(keys[2], (256, 128, k3, k3), 128 * k3 * k3),
        "c3_b": jnp.zeros((256,), jnp.float32),
        "fc1_w": w_init(keys[3], (2048, 256 * smid * smid), 256 * smid * smid),
        "fc1_b": jnp.zeros((2048,), jnp.float32),
        "fc2_w": w_init(keys[4], (2048, 2048), 2048),
        "fc2_b": jnp.zeros((2048,), jnp.float32),
        "last": [
            (w_init(keys[5 + i], (n, 2048), 2048), jnp.zeros((n,), jnp.float32))
            for i, (_, n) in enumerate(taskcla)
        ],
        # HAT embeddings: uniform(0, 2) as in the reference module
        "ec1": jax.random.uniform(keys[10], (ntasks, 64), jnp.float32, 0.0, 2.0),
        "ec2": jax.random.uniform(keys[11], (ntasks, 128), jnp.float32, 0.0, 2.0),
        "ec3": jax.random.uniform(keys[12], (ntasks, 256), jnp.float32, 0.0, 2.0),
        "efc1": jax.random.uniform(keys[13], (ntasks, 2048), jnp.float32, 0.0, 2.0),
        "efc2": jax.random.uniform(keys[14], (ntasks, 2048), jnp.float32, 0.0, 2.0),
    }
    return params


# --------------------------------------------------------------------------
# One-time weight preparation for the kernel layout (bf16, per-tap, padded)
# --------------------------------------------------------------------------
def prepare_params(params, taskcla):
    smid = params["smid"]
    prep = {"smid": smid}

    def conv_taps(w, cin_pad=0, cout_pad=0):
        Cout, Cin, k, _ = w.shape
        if cin_pad:
            w = jnp.pad(w, ((0, 0), (0, cin_pad), (0, 0), (0, 0)))
        taps = w.transpose(2, 3, 1, 0).reshape(k * k, Cin + cin_pad, Cout)
        if cout_pad:
            taps = jnp.pad(taps, ((0, 0), (0, 0), (0, cout_pad)))
        return taps.astype(jnp.bfloat16)

    # conv1: 64 output channels zero-padded to 128 (lane-dense output)
    c1_cout = params["c1_w"].shape[0]
    c1_pad = _round_up(c1_cout, 128) - c1_cout
    prep["c1_pad"] = c1_pad
    prep["k1"] = params["c1_w"].shape[-1]
    prep["c1_w"] = conv_taps(params["c1_w"], cout_pad=c1_pad)
    prep["c1_b"] = jnp.pad(params["c1_b"], (0, c1_pad))

    # conv2: input channels padded to match conv1's padded output
    prep["k2"] = params["c2_w"].shape[-1]
    prep["c2_w"] = conv_taps(params["c2_w"], cin_pad=c1_pad)
    prep["c2_b"] = params["c2_b"]

    # conv3
    prep["k3"] = params["c3_w"].shape[-1]
    prep["c3_w"] = conv_taps(params["c3_w"])
    prep["c3_b"] = params["c3_b"]

    # fc1: permute columns from NCHW (c,i,j) flatten order to NHWC (i,j,c)
    Cout3 = params["c3_w"].shape[0]
    fc1 = params["fc1_w"].reshape(2048, Cout3, smid, smid)
    fc1 = fc1.transpose(0, 2, 3, 1).reshape(2048, smid * smid * Cout3)
    prep["fc1_w"] = fc1.T.astype(jnp.bfloat16)            # (K, 2048)
    prep["fc1_b"] = params["fc1_b"]
    prep["fc2_w"] = params["fc2_w"].T.astype(jnp.bfloat16)
    prep["fc2_b"] = params["fc2_b"]

    # task heads: one lane-dense (2048, Npad) matrix, sliced after the matmul
    head_ws = [w.T for (w, _) in params["last"]]
    head_bs = [bb for (_, bb) in params["last"]]
    wh = jnp.concatenate(head_ws, axis=1)                  # (2048, sum_n)
    bh = jnp.concatenate(head_bs, axis=0)
    Ntot = wh.shape[1]
    Npad = _round_up(Ntot, 128)
    prep["last_w"] = jnp.pad(wh, ((0, 0), (0, Npad - Ntot))).astype(jnp.bfloat16)
    prep["last_b"] = jnp.pad(bh, (0, Npad - Ntot))
    prep["head_sizes"] = [int(n) for (_, n) in taskcla]

    for name in ("ec1", "ec2", "ec3", "efc1", "efc2"):
        prep[name] = params[name]
    return prep


def compute_masks(prep, t, s):
    gc1 = jax.nn.sigmoid(s * prep["ec1"][t])
    gc2 = jax.nn.sigmoid(s * prep["ec2"][t])
    gc3 = jax.nn.sigmoid(s * prep["ec3"][t])
    gfc1 = jax.nn.sigmoid(s * prep["efc1"][t])
    gfc2 = jax.nn.sigmoid(s * prep["efc2"][t])
    return [gc1, gc2, gc3, gfc1, gfc2]


# --------------------------------------------------------------------------
# Full forward pass (mirrors Net.forward; dropout = identity)
# --------------------------------------------------------------------------
def net_forward(prep, t, x, s=1.0, cfg=None):
    if cfg is None:
        cfg = _tpu_config()
    masks = compute_masks(prep, t, s)
    gc1, gc2, gc3, gfc1, gfc2 = masks

    # HAT gates are strictly positive sigmoids -> the per-channel scale
    # commutes with ReLU and max-pool, so it is fused into each conv kernel.
    gc1p = jnp.pad(gc1, (0, prep["c1_pad"]))

    B, C, H, W = x.shape
    # NCHW -> flattened NHWC (B, H*W, C) once; conv layers chain this layout.
    h = x.transpose(0, 2, 3, 1).reshape(B, H * W, C).astype(jnp.bfloat16)

    h, H, W = conv_pool_gate(h, H, W, prep["k1"], prep["c1_w"], prep["c1_b"], gc1p, cfg)
    h, H, W = conv_pool_gate(h, H, W, prep["k2"], prep["c2_w"], prep["c2_b"], gc2, cfg)
    h, H, W = conv_pool_gate(h, H, W, prep["k3"], prep["c3_w"], prep["c3_b"], gc3, cfg)

    h = h.reshape(B, -1)                                   # (B, smid*smid*256), NHWC order
    h = pallas_linear(h, prep["fc1_w"], prep["fc1_b"], gate=gfc1, relu=True, cfg=cfg)
    h = pallas_linear(h, prep["fc2_w"], prep["fc2_b"], gate=gfc2, relu=True, cfg=cfg)

    # all per-task heads in one lane-dense matmul, sliced afterwards
    y_all = pallas_linear(h, prep["last_w"], prep["last_b"], gate=None,
                          relu=False, out_dtype=jnp.float32, cfg=cfg)
    y = []
    off = 0
    for n in prep["head_sizes"]:
        y.append(y_all[:, off:off + n])
        off += n
    return y, masks


# --------------------------------------------------------------------------
# Pure-JAX f32 reference (NCHW, mirrors the PyTorch module) for validation
# --------------------------------------------------------------------------
def net_forward_reference(params, t, x, s=1.0):
    gc1 = jax.nn.sigmoid(s * params["ec1"][t])
    gc2 = jax.nn.sigmoid(s * params["ec2"][t])
    gc3 = jax.nn.sigmoid(s * params["ec3"][t])
    gfc1 = jax.nn.sigmoid(s * params["efc1"][t])
    gfc2 = jax.nn.sigmoid(s * params["efc2"][t])

    def conv(h, w, bb):
        y = jax.lax.conv_general_dilated(
            h, w, window_strides=(1, 1), padding="VALID",
            dimension_numbers=("NCHW", "OIHW", "NCHW"))
        return y + bb.reshape(1, -1, 1, 1)

    def pool(h):
        return jax.lax.reduce_window(h, -jnp.inf, jax.lax.max,
                                     (1, 1, 2, 2), (1, 1, 2, 2), "VALID")

    h = pool(jax.nn.relu(conv(x, params["c1_w"], params["c1_b"]))) * gc1.reshape(1, -1, 1, 1)
    h = pool(jax.nn.relu(conv(h, params["c2_w"], params["c2_b"]))) * gc2.reshape(1, -1, 1, 1)
    h = pool(jax.nn.relu(conv(h, params["c3_w"], params["c3_b"]))) * gc3.reshape(1, -1, 1, 1)
    h = h.reshape(x.shape[0], -1)
    h = jax.nn.relu(h @ params["fc1_w"].T + params["fc1_b"]) * gfc1
    h = jax.nn.relu(h @ params["fc2_w"].T + params["fc2_b"]) * gfc2
    return [h @ w.T + bb for (w, bb) in params["last"]]


if __name__ == "__main__":
    key = jax.random.PRNGKey(0)
    ncha, size = 4, 16
    batch = 2
    taskcla = [(0, 5), (1, 5)]

    kp, kx = jax.random.split(key)
    params = init_params(kp, ncha, size, taskcla)
    prep = prepare_params(params, taskcla)
    x = jax.random.normal(kx, (batch, ncha, size, size), jnp.float32)

    y, masks = net_forward(prep, t=0, x=x, s=1.0)
    jax.block_until_ready(y)
    jax.block_until_ready(masks)
    assert all(o.shape == (batch, n) for o, (_, n) in zip(y, taskcla))

    # Loose tolerance check against the pure-JAX f32 reference (kernel path is
    # bf16 with f32 accumulation, so only a few-percent deviation is expected).
    y_ref = net_forward_reference(params, t=0, x=x, s=1.0)
    max_err = max(float(jnp.max(jnp.abs(a.astype(jnp.float32) - b)))
                  for a, b in zip(y, y_ref))
    assert max_err < 0.25, f"max abs error vs f32 reference: {max_err}"

    print("KERNEL_OK")
</pallas_src>

<mosaic_0001>
module attributes {stable_mosaic.version = 11 : i64} {
  func.func @_conv_pool_kernel(%arg0: i32, %arg1: memref<1x256x4xbf16, #tpu.memory_space<vmem>>, %arg2: memref<4x4x128xbf16, #tpu.memory_space<vmem>>, %arg3: memref<1x128xf32, #tpu.memory_space<vmem>>, %arg4: memref<1x128xf32, #tpu.memory_space<vmem>>, %arg5: memref<1x49x128xbf16, #tpu.memory_space<vmem>>, %arg6: memref<239x128xf32, #tpu.memory_space<vmem>>, %arg7: memref<98x128xf32, #tpu.memory_space<vmem>>) attributes {dimension_semantics = [#tpu.dimension_semantics<parallel>], iteration_bounds = array<i64: 2>, scalar_prefetch = 0 : i64, scratch_operands = 2 : i64, tpu.core_type = #tpu.core_type<tc>, window_params = [{transform_indices = @transform_0, window_bounds = array<i64: 1, 256, 4>}, {pipeline_mode = #tpu.pipeline_mode<synchronous>, transform_indices = @transform_1, window_bounds = array<i64: 4, 4, 128>}, {pipeline_mode = #tpu.pipeline_mode<synchronous>, transform_indices = @transform_2, window_bounds = array<i64: 1, 128>}, {pipeline_mode = #tpu.pipeline_mode<synchronous>, transform_indices = @transform_3, window_bounds = array<i64: 1, 128>}, {transform_indices = @transform_4, window_bounds = array<i64: 1, 49, 128>}]} {
    %c0 = arith.constant 0 : index
    %c0_0 = arith.constant 0 : index
    %c0_1 = arith.constant 0 : index
    %0 = vector.load %arg1[%c0, %c0_0, %c0_1] : memref<1x256x4xbf16, #tpu.memory_space<vmem>>, vector<1x239x4xbf16>
    %1 = vector.shape_cast %0 : vector<1x239x4xbf16> to vector<239x4xbf16>
    %c0_2 = arith.constant 0 : index
    %c0_3 = arith.constant 0 : index
    %c0_4 = arith.constant 0 : index
    %2 = vector.load %arg2[%c0_2, %c0_3, %c0_4] : memref<4x4x128xbf16, #tpu.memory_space<vmem>>, vector<1x4x128xbf16>
    %3 = vector.shape_cast %2 : vector<1x4x128xbf16> to vector<4x128xbf16>
    %cst = arith.constant dense<0.000000e+00> : vector<239x128xf32>
    %4 = tpu.matmul %1, %3, %cst {dimension_numbers = #tpu.dot_dimension_numbers<[1], [0], [0], [1], [0, 0, 1, 1], [], []>} : vector<239x4xbf16>, vector<4x128xbf16>, vector<239x128xf32> -> vector<239x128xf32>
    %c0_5 = arith.constant 0 : index
    %c1 = arith.constant 1 : index
    %c0_6 = arith.constant 0 : index
    %5 = vector.load %arg1[%c0_5, %c1, %c0_6] : memref<1x256x4xbf16, #tpu.memory_space<vmem>>, vector<1x239x4xbf16>
    %6 = vector.shape_cast %5 : vector<1x239x4xbf16> to vector<239x4xbf16>
    %c1_7 = arith.constant 1 : index
    %c0_8 = arith.constant 0 : index
    %c0_9 = arith.constant 0 : index
    %7 = vector.load %arg2[%c1_7, %c0_8, %c0_9] : memref<4x4x128xbf16, #tpu.memory_space<vmem>>, vector<1x4x128xbf16>
    %8 = vector.shape_cast %7 : vector<1x4x128xbf16> to vector<4x128xbf16>
    %cst_10 = arith.constant dense<0.000000e+00> : vector<239x128xf32>
    %9 = tpu.matmul %6, %8, %cst_10 {dimension_numbers = #tpu.dot_dimension_numbers<[1], [0], [0], [1], [0, 0, 1, 1], [], []>} : vector<239x4xbf16>, vector<4x128xbf16>, vector<239x128xf32> -> vector<239x128xf32>
    %10 = arith.addf %4, %9 : vector<239x128xf32>
    %c0_11 = arith.constant 0 : index
    %c16 = arith.constant 16 : index
    %c0_12 = arith.constant 0 : index
    %11 = vector.load %arg1[%c0_11, %c16, %c0_12] : memref<1x256x4xbf16, #tpu.memory_space<vmem>>, vector<1x239x4xbf16>
    %12 = vector.shape_cast %11 : vector<1x239x4xbf16> to vector<239x4xbf16>
    %c2 = arith.constant 2 : index
    %c0_13 = arith.constant 0 : index
    %c0_14 = arith.constant 0 : index
    %13 = vector.load %arg2[%c2, %c0_13, %c0_14] : memref<4x4x128xbf16, #tpu.memory_space<vmem>>, vector<1x4x128xbf16>
    %14 = vector.shape_cast %13 : vector<1x4x128xbf16> to vector<4x128xbf16>
    %cst_15 = arith.constant dense<0.000000e+00> : vector<239x128xf32>
    %15 = tpu.matmul %12, %14, %cst_15 {dimension_numbers = #tpu.dot_dimension_numbers<[1], [0], [0], [1], [0, 0, 1, 1], [], []>} : vector<239x4xbf16>, vector<4x128xbf16>, vector<239x128xf32> -> vector<239x128xf32>
    %16 = arith.addf %10, %15 : vector<239x128xf32>
    %c0_16 = arith.constant 0 : index
    %c17 = arith.constant 17 : index
    %c0_17 = arith.constant 0 : index
    %17 = vector.load %arg1[%c0_16, %c17, %c0_17] : memref<1x256x4xbf16, #tpu.memory_space<vmem>>, vector<1x239x4xbf16>
    %18 = vector.shape_cast %17 : vector<1x239x4xbf16> to vector<239x4xbf16>
    %c3 = arith.constant 3 : index
    %c0_18 = arith.constant 0 : index
    %c0_19 = arith.constant 0 : index
    %19 = vector.load %arg2[%c3, %c0_18, %c0_19] : memref<4x4x128xbf16, #tpu.memory_space<vmem>>, vector<1x4x128xbf16>
    %20 = vector.shape_cast %19 : vector<1x4x128xbf16> to vector<4x128xbf16>
    %cst_20 = arith.constant dense<0.000000e+00> : vector<239x128xf32>
    %21 = tpu.matmul %18, %20, %cst_20 {dimension_numbers = #tpu.dot_dimension_numbers<[1], [0], [0], [1], [0, 0, 1, 1], [], []>} : vector<239x4xbf16>, vector<4x128xbf16>, vector<239x128xf32> -> vector<239x128xf32>
    %22 = arith.addf %16, %21 : vector<239x128xf32>
    %c0_21 = arith.constant 0 : index
    %c0_22 = arith.constant 0 : index
    %23 = vector.load %arg3[%c0_21, %c0_22] : memref<1x128xf32, #tpu.memory_space<vmem>>, vector<1x128xf32>
    %24 = vector.broadcast %23 : vector<1x128xf32> to vector<239x128xf32>
    %25 = arith.addf %22, %24 : vector<239x128xf32>
    %cst_23 = arith.constant 0.000000e+00 : f32
    %26 = vector.broadcast %cst_23 : f32 to vector<239x128xf32>
    %27 = arith.maximumf %25, %26 : vector<239x128xf32>
    %c0_24 = arith.constant 0 : index
    %c0_25 = arith.constant 0 : index
    %28 = vector.load %arg4[%c0_24, %c0_25] : memref<1x128xf32, #tpu.memory_space<vmem>>, vector<1x128xf32>
    %29 = vector.broadcast %28 : vector<1x128xf32> to vector<239x128xf32>
    %30 = arith.mulf %27, %29 : vector<239x128xf32>
    %c0_26 = arith.constant 0 : index
    %c0_27 = arith.constant 0 : index
    %31 = vector.load %arg6[%c0_26, %c0_27] : memref<239x128xf32, #tpu.memory_space<vmem>>, vector<239x128xf32>
    tpu.vector_store %arg6[%c0_26, %c0_27], %30 {strides = array<i32>} : memref<239x128xf32, #tpu.memory_space<vmem>>, vector<239x128xf32>,
    %c0_28 = arith.constant 0 : index
    %c0_29 = arith.constant 0 : index
    %32 = vector.load %arg6[%c0_28, %c0_29] : memref<239x128xf32, #tpu.memory_space<vmem>>, vector<14x128xf32>
    %c16_30 = arith.constant 16 : index
    %c0_31 = arith.constant 0 : index
    %33 = vector.load %arg6[%c16_30, %c0_31] : memref<239x128xf32, #tpu.memory_space<vmem>>, vector<14x128xf32>
    %34 = arith.maximumf %32, %33 : vector<14x128xf32>
    %c0_32 = arith.constant 0 : index
    %c0_33 = arith.constant 0 : index
    %35 = vector.load %arg7[%c0_32, %c0_33] : memref<98x128xf32, #tpu.memory_space<vmem>>, vector<14x128xf32>
    tpu.vector_store %arg7[%c0_32, %c0_33], %34 {strides = array<i32>} : memref<98x128xf32, #tpu.memory_space<vmem>>, vector<14x128xf32>,
    %c32 = arith.constant 32 : index
    %c0_34 = arith.constant 0 : index
    %36 = vector.load %arg6[%c32, %c0_34] : memref<239x128xf32, #tpu.memory_space<vmem>>, vector<14x128xf32>
    %c48 = arith.constant 48 : index
    %c0_35 = arith.constant 0 : index
    %37 = vector.load %arg6[%c48, %c0_35] : memref<239x128xf32, #tpu.memory_space<vmem>>, vector<14x128xf32>
    %38 = arith.maximumf %36, %37 : vector<14x128xf32>
    %c14 = arith.constant 14 : index
    %c0_36 = arith.constant 0 : index
    %39 = vector.load %arg7[%c14, %c0_36] : memref<98x128xf32, #tpu.memory_space<vmem>>, vector<14x128xf32>
    tpu.vector_store %arg7[%c14, %c0_36], %38 {strides = array<i32>} : memref<98x128xf32, #tpu.memory_space<vmem>>, vector<14x128xf32>,
    %c64 = arith.constant 64 : index
    %c0_37 = arith.constant 0 : index
    %40 = vector.load %arg6[%c64, %c0_37] : memref<239x128xf32, #tpu.memory_space<vmem>>, vector<14x128xf32>
    %c80 = arith.constant 80 : index
    %c0_38 = arith.constant 0 : index
    %41 = vector.load %arg6[%c80, %c0_38] : memref<239x128xf32, #tpu.memory_space<vmem>>, vector<14x128xf32>
    %42 = arith.maximumf %40, %41 : vector<14x128xf32>
    %c28 = arith.constant 28 : index
    %c0_39 = arith.constant 0 : index
    %43 = vector.load %arg7[%c28, %c0_39] : memref<98x128xf32, #tpu.memory_space<vmem>>, vector<14x128xf32>
    tpu.vector_store %arg7[%c28, %c0_39], %42 {strides = array<i32>} : memref<98x128xf32, #tpu.memory_space<vmem>>, vector<14x128xf32>,
    %c96 = arith.constant 96 : index
    %c0_40 = arith.constant 0 : index
    %44 = vector.load %arg6[%c96, %c0_40] : memref<239x128xf32, #tpu.memory_space<vmem>>, vector<14x128xf32>
    %c112 = arith.constant 112 : index
    %c0_41 = arith.constant 0 : index
    %45 = vector.load %arg6[%c112, %c0_41] : memref<239x128xf32, #tpu.memory_space<vmem>>, vector<14x128xf32>
    %46 = arith.maximumf %44, %45 : vector<14x128xf32>
    %c42 = arith.constant 42 : index
    %c0_42 = arith.constant 0 : index
    %47 = vector.load %arg7[%c42, %c0_42] : memref<98x128xf32, #tpu.memory_space<vmem>>, vector<14x128xf32>
    tpu.vector_store %arg7[%c42, %c0_42], %46 {strides = array<i32>} : memref<98x128xf32, #tpu.memory_space<vmem>>, vector<14x128xf32>,
    %c128 = arith.constant 128 : index
    %c0_43 = arith.constant 0 : index
    %48 = vector.load %arg6[%c128, %c0_43] : memref<239x128xf32, #tpu.memory_space<vmem>>, vector<14x128xf32>
    %c144 = arith.constant 144 : index
    %c0_44 = arith.constant 0 : index
    %49 = vector.load %arg6[%c144, %c0_44] : memref<239x128xf32, #tpu.memory_space<vmem>>, vector<14x128xf32>
    %50 = arith.maximumf %48, %49 : vector<14x128xf32>
    %c56 = arith.constant 56 : index
    %c0_45 = arith.constant 0 : index
    %51 = vector.load %arg7[%c56, %c0_45] : memref<98x128xf32, #tpu.memory_space<vmem>>, vector<14x128xf32>
    tpu.vector_store %arg7[%c56, %c0_45], %50 {strides = array<i32>} : memref<98x128xf32, #tpu.memory_space<vmem>>, vector<14x128xf32>,
    %c160 = arith.constant 160 : index
    %c0_46 = arith.constant 0 : index
    %52 = vector.load %arg6[%c160, %c0_46] : memref<239x128xf32, #tpu.memory_space<vmem>>, vector<14x128xf32>
    %c176 = arith.constant 176 : index
    %c0_47 = arith.constant 0 : index
    %53 = vector.load %arg6[%c176, %c0_47] : memref<239x128xf32, #tpu.memory_space<vmem>>, vector<14x128xf32>
    %54 = arith.maximumf %52, %53 : vector<14x128xf32>
    %c70 = arith.constant 70 : index
    %c0_48 = arith.constant 0 : index
    %55 = vector.load %arg7[%c70, %c0_48] : memref<98x128xf32, #tpu.memory_space<vmem>>, vector<14x128xf32>
    tpu.vector_store %arg7[%c70, %c0_48], %54 {strides = array<i32>} : memref<98x128xf32, #tpu.memory_space<vmem>>, vector<14x128xf32>,
    %c192 = arith.constant 192 : index
    %c0_49 = arith.constant 0 : index
    %56 = vector.load %arg6[%c192, %c0_49] : memref<239x128xf32, #tpu.memory_space<vmem>>, vector<14x128xf32>
    %c208 = arith.constant 208 : index
    %c0_50 = arith.constant 0 : index
    %57 = vector.load %arg6[%c208, %c0_50] : memref<239x128xf32, #tpu.memory_space<vmem>>, vector<14x128xf32>
    %58 = arith.maximumf %56, %57 : vector<14x128xf32>
    %c84 = arith.constant 84 : index
    %c0_51 = arith.constant 0 : index
    %59 = vector.load %arg7[%c84, %c0_51] : memref<98x128xf32, #tpu.memory_space<vmem>>, vector<14x128xf32>
    tpu.vector_store %arg7[%c84, %c0_51], %58 {strides = array<i32>} : memref<98x128xf32, #tpu.memory_space<vmem>>, vector<14x128xf32>,
    %c0_52 = arith.constant 0 : index
    %c0_53 = arith.constant 0 : index
    %60 = tpu.strided_load %arg7[%c0_52, %c0_53] {strides = array<i32: 2, 1>} : memref<98x128xf32, #tpu.memory_space<vmem>>, vector<49x128xf32>
    %c1_54 = arith.constant 1 : index
    %c0_55 = arith.constant 0 : index
    %61 = tpu.strided_load %arg7[%c1_54, %c0_55] {strides = array<i32: 2, 1>} : memref<98x128xf32, #tpu.memory_space<vmem>>, vector<49x128xf32>
    %62 = arith.maximumf %60, %61 : vector<49x128xf32>
    %63 = arith.truncf %62 : vector<49x128xf32> to vector<49x128xbf16>
    %c0_56 = arith.constant 0 : index
    %c0_57 = arith.constant 0 : index
    %c0_58 = arith.constant 0 : index
    %64 = vector.load %arg5[%c0_56, %c0_57, %c0_58] : memref<1x49x128xbf16, #tpu.memory_space<vmem>>, vector<1x49x128xbf16>
    %65 = vector.shape_cast %64 : vector<1x49x128xbf16> to vector<49x128xbf16>
    %66 = vector.shape_cast %63 : vector<49x128xbf16> to vector<1x49x128xbf16>
    tpu.vector_store %arg5[%c0_56, %c0_57, %c0_58], %66 {strides = array<i32>} : memref<1x49x128xbf16, #tpu.memory_space<vmem>>, vector<1x49x128xbf16>,
    return
  }
  func.func @transform_0(%arg0: i32) -> (i32, i32, i32) {
    %c0_i32 = arith.constant 0 : i32
    %c0_i32_0 = arith.constant 0 : i32
    %c0_i32_1 = arith.constant 0 : i32
    return %arg0, %c0_i32, %c0_i32_0 : i32, i32, i32
  }
  func.func @transform_1(%arg0: i32) -> (i32, i32, i32) {
    %c0_i32 = arith.constant 0 : i32
    %c0_i32_0 = arith.constant 0 : i32
    %c0_i32_1 = arith.constant 0 : i32
    %c0_i32_2 = arith.constant 0 : i32
    return %c0_i32, %c0_i32_0, %c0_i32_1 : i32, i32, i32
  }
  func.func @transform_2(%arg0: i32) -> (i32, i32) {
    %c0_i32 = arith.constant 0 : i32
    %c0_i32_0 = arith.constant 0 : i32
    %c0_i32_1 = arith.constant 0 : i32
    return %c0_i32, %c0_i32_0 : i32, i32
  }
  func.func @transform_3(%arg0: i32) -> (i32, i32) {
    %c0_i32 = arith.constant 0 : i32
    %c0_i32_0 = arith.constant 0 : i32
    %c0_i32_1 = arith.constant 0 : i32
    return %c0_i32, %c0_i32_0 : i32, i32
  }
  func.func @transform_4(%arg0: i32) -> (i32, i32, i32) {
    %c0_i32 = arith.constant 0 : i32
    %c0_i32_0 = arith.constant 0 : i32
    %c0_i32_1 = arith.constant 0 : i32
    return %arg0, %c0_i32, %c0_i32_0 : i32, i32, i32
  }
}

</mosaic_0001>

<llo_original>
// kernel: tpu_custom_call.1
$region0: #{tpu_custom_call.1}
  #allocation0 [shape = 'u32[]', space=smem, size = 0x4, offset = 0x4, fixed_abs, tag = 'smem constant byte address 0x4 - core index']
  #allocation1 [shape = 'u32[144,128]{1,0:T(1,128)}', space=vmem, size = 0x12000, scoped, tag = 'internal scratch']
  #allocation2 [shape = 'f32[239,128]{1,0:T(8,128)}', space=vmem, size = 0x1e000, scoped, tag = 'scratch operand']
  #allocation3 [shape = 'f32[98,128]{1,0:T(8,128)}', space=vmem, size = 0xd000, scoped, tag = 'scratch operand']
  %s0 = inlined_call_operand.vmem [shape: bf16[2,256,4], index: 0, kind: input, shape index: {}]
  %s1 = inlined_call_operand.vmem [shape: bf16[4,4,128], index: 1, kind: input, shape index: {}]
  %s2 = inlined_call_operand.vmem [shape: f32[1,128], index: 2, kind: input, shape index: {}]
  %s3 = inlined_call_operand.vmem [shape: f32[1,128], index: 3, kind: input, shape index: {}]
  %s4 = inlined_call_operand.vmem [shape: bf16[2,49,128], index: 4, kind: output, shape index: {}]
  %s5 = sld [smem:[#allocation0]]
  $region49: #{tpu_custom_call.1} parent=0
    _
  %s7 = ssub.s32 1, %s5
  %s8 = scalar_select 0, %s7, %s5
  loop: start=0, step=1, limit=4
  $region2: #{tpu_custom_call.1} parent=0 // loop_pre_header
    _
  $region3: #{tpu_custom_call.1} parent=0 // loop_header
    %s10 = sphi 0, %s14
    %p11 = scmp.ge.s32.totalorder %s10, 4
    %s20 = sphi 0, %s22
    %s23 = sphi 0, %s20
    %s24 = sphi 0, %s23
    %s40 = sphi 0, %s24
    %s44 = sphi 0, %s44
    %s46 = sphi 0, %s44
    %s47 = sphi 0, %s46
    %s61 = sphi 0, %s47
    %s65 = sphi 0, %s65
    %s67 = sphi 0, %s65
    %s68 = sphi 0, %s67
    %s82 = sphi 0, %s68
    %s86 = sphi 0, %s86
    %s88 = sphi 0, %s86
    %s89 = sphi 0, %s88
    %s103 = sphi 0, %s89
    %s109 = sphi 0, %s111
    %s112 = sphi 0, %s109
    %s113 = sphi 0, %s112
    %s129 = sphi 0, %s113
  $region4: #{tpu_custom_call.1} parent=0 // loop_header_branch
    %13 = sbr.rel (%p11) target = $region8
  $region5: #{tpu_custom_call.1} parent=0 // loop_body
    %s15 = ssub.s32 %s10, 1
    %s16 = ssub.s32 %s10, 2
    %s17 = sadd.s32 %s10, 1
    %s18 = ssub.s32 %s10, %s17
    %p19 = scmp.eq.s32.totalorder %s18, 0
    %s21 = sadd.s32 %s20, 1
    %s22 = scalar_select %p19, %s20, %s21
    %p25 = pneg %p19
    %p26 = scmp.eq.s32.totalorder %s10, 1
    %p27 = por %p25, %p26
    %p28 = scmp.ne.s32.totalorder %s20, %s23
    %p29 = scmp.eq.s32.totalorder %s10, 0
    %p30 = por %p28, %p29
    %p31 = scmp.ne.s32.totalorder %s20, %s23
    %p32 = scmp.eq.s32.totalorder %s15, 1
    %p33 = por %p31, %p32
    %p34 = scmp.ne.s32.totalorder %s23, %s24
    %p35 = scmp.eq.s32.totalorder %s15, 0
    %p36 = por %p34, %p35
    %p37 = scmp.ne.s32.totalorder %s23, %s24
    %p38 = scmp.eq.s32.totalorder %s16, 1
    %p39 = por %p37, %p38
    %p41 = scmp.ne.s32.totalorder %s24, %s40
    %p42 = scmp.eq.s32.totalorder %s16, 0
    %p43 = por %p41, %p42
    %s45 = sadd.s32 %s44, 1
    %p48 = scmp.eq.s32.totalorder %s10, 1
    %p49 = scmp.ne.s32.totalorder %s44, %s46
    %p50 = scmp.eq.s32.totalorder %s10, 0
    %p51 = por %p49, %p50
    %p52 = scmp.ne.s32.totalorder %s44, %s46
    %p53 = scmp.eq.s32.totalorder %s15, 1
    %p54 = por %p52, %p53
    %p55 = scmp.ne.s32.totalorder %s46, %s47
    %p56 = scmp.eq.s32.totalorder %s15, 0
    %p57 = por %p55, %p56
    %p58 = scmp.ne.s32.totalorder %s46, %s47
    %p59 = scmp.eq.s32.totalorder %s16, 1
    %p60 = por %p58, %p59
    %p62 = scmp.ne.s32.totalorder %s47, %s61
    %p63 = scmp.eq.s32.totalorder %s16, 0
    %p64 = por %p62, %p63
    %s66 = sadd.s32 %s65, 1
    %p69 = scmp.eq.s32.totalorder %s10, 1
    %p70 = scmp.ne.s32.totalorder %s65, %s67
    %p71 = scmp.eq.s32.totalorder %s10, 0
    %p72 = por %p70, %p71
    %p73 = scmp.ne.s32.totalorder %s65, %s67
    %p74 = scmp.eq.s32.totalorder %s15, 1
    %p75 = por %p73, %p74
    %p76 = scmp.ne.s32.totalorder %s67, %s68
    %p77 = scmp.eq.s32.totalorder %s15, 0
    %p78 = por %p76, %p77
    %p79 = scmp.ne.s32.totalorder %s67, %s68
    %p80 = scmp.eq.s32.totalorder %s16, 1
    %p81 = por %p79, %p80
    %p83 = scmp.ne.s32.totalorder %s68, %s82
    %p84 = scmp.eq.s32.totalorder %s16, 0
    %p85 = por %p83, %p84
    %s87 = sadd.s32 %s86, 1
    %p90 = scmp.eq.s32.totalorder %s10, 1
    %p91 = scmp.ne.s32.totalorder %s86, %s88
    %p92 = scmp.eq.s32.totalorder %s10, 0
    %p93 = por %p91, %p92
    %p94 = scmp.ne.s32.totalorder %s86, %s88
    %p95 = scmp.eq.s32.totalorder %s15, 1
    %p96 = por %p94, %p95
    %p97 = scmp.ne.s32.totalorder %s88, %s89
    %p98 = scmp.eq.s32.totalorder %s15, 0
    %p99 = por %p97, %p98
    %p100 = scmp.ne.s32.totalorder %s88, %s89
    %p101 = scmp.eq.s32.totalorder %s16, 1
    %p102 = por %p100, %p101
    %p104 = scmp.ne.s32.totalorder %s89, %s103
    %p105 = scmp.eq.s32.totalorder %s16, 0
    %p106 = por %p104, %p105
    %s107 = ssub.s32 %s10, %s17
    %p108 = scmp.eq.s32.totalorder %s107, 0
    %s110 = sadd.s32 %s109, 1
    %s111 = scalar_select %p108, %s109, %s110
    %p114 = pneg %p108
    %p115 = scmp.eq.s32.totalorder %s10, 1
    %p116 = por %p114, %p115
    %p117 = scmp.ne.s32.totalorder %s109, %s112
    %p118 = scmp.eq.s32.totalorder %s10, 0
    %p119 = por %p117, %p118
    %p120 = scmp.ne.s32.totalorder %s109, %s112
    %p121 = scmp.eq.s32.totalorder %s15, 1
    %p122 = por %p120, %p121
    %p123 = scmp.ne.s32.totalorder %s112, %s113
    %p124 = scmp.eq.s32.totalorder %s15, 0
    %p125 = por %p123, %p124
    %p126 = scmp.ne.s32.totalorder %s112, %s113
    %p127 = scmp.eq.s32.totalorder %s16, 1
    %p128 = por %p126, %p127
    %p130 = scmp.ne.s32.totalorder %s113, %s129
    %p131 = scmp.eq.s32.totalorder %s16, 0
    %p132 = por %p130, %p131
    %p133 = scmp.le.s32.totalorder 1, %s10
    %p134 = scmp.lt.s32.totalorder %s10, 3
    %p135 = pnand %p133, %p134
    %p136 = pneg %p135
    // Predicated region
    $region9: #{tpu_custom_call.1} parent=5 // pred_check
      _
    $region10: #{tpu_custom_call.1} parent=5 // pred_check_branch
      %138 = sbr.rel (%p135) target = $region12
    $region11: #{tpu_custom_call.1} parent=5 // pred_region
      %s139 = ssub.s32 %s10, 1
      // Predicated region
      $region13: #{tpu_custom_call.1} parent=11 // pred_check
        %p140 = pneg %p57
      $region14: #{tpu_custom_call.1} parent=11 // pred_check_branch
        %142 = sbr.rel (%p140) target = $region16
      $region15: #{tpu_custom_call.1} parent=11 // pred_region
        _
      $region16: #{tpu_custom_call.1} parent=11 // pred_fallthru
        _
      // Predicated region
      $region17: #{tpu_custom_call.1} parent=11 // pred_check
        %p143 = pneg %p78
      $region18: #{tpu_custom_call.1} parent=11 // pred_check_branch
        %145 = sbr.rel (%p143) target = $region20
      $region19: #{tpu_custom_call.1} parent=11 // pred_region
        _
      $region20: #{tpu_custom_call.1} parent=11 // pred_fallthru
        _
      // Predicated region
      $region21: #{tpu_custom_call.1} parent=11 // pred_check
        %p146 = pneg %p99
      $region22: #{tpu_custom_call.1} parent=11 // pred_check_branch
        %148 = sbr.rel (%p146) target = $region24
      $region23: #{tpu_custom_call.1} parent=11 // pred_region
        _
      $region24: #{tpu_custom_call.1} parent=11 // pred_fallthru
        _
    $region12: #{tpu_custom_call.1} parent=5 // pred_fallthru
      _
    %p149 = scmp.lt.s32.totalorder %s10, 2
    // Predicated region
    $region25: #{tpu_custom_call.1} parent=5 // pred_check
      %p150 = pneg %p149
    $region26: #{tpu_custom_call.1} parent=5 // pred_check_branch
      %152 = sbr.rel (%p150) target = $region28
    $region27: #{tpu_custom_call.1} parent=5 // pred_region
      // Predicated region
      $region29: #{tpu_custom_call.1} parent=27 // pred_check
        %p153 = pneg %p30
      $region30: #{tpu_custom_call.1} parent=27 // pred_check_branch
        %155 = sbr.rel (%p153) target = $region32
      $region31: #{tpu_custom_call.1} parent=27 // pred_region
        %p156 = scmp.lt.s32.totalorder %s10, 1
        %s157 = scalar_select %p156, %s10, 1
        %s158 = smul.addr %s157, 32
        %s159 = smul.addr %s158, 4
        %s160 = scalar_lea.vmem %s0, %s159
      $region32: #{tpu_custom_call.1} parent=27 // pred_fallthru
        _
    $region28: #{tpu_custom_call.1} parent=5 // pred_fallthru
      _
    %p161 = scmp.le.s32.totalorder 1, %s10
    %p162 = scmp.lt.s32.totalorder %s10, 3
    %p163 = pnand %p161, %p162
    %p164 = pneg %p163
    // Predicated region
    $region33: #{tpu_custom_call.1} parent=5 // pred_check
      _
    $region34: #{tpu_custom_call.1} parent=5 // pred_check_branch
      %166 = sbr.rel (%p163) target = $region36
    $region35: #{tpu_custom_call.1} parent=5 // pred_region
      %s167 = ssub.s32 %s10, 1
      %p168 = scmp.lt.s32.totalorder %s15, 1
      %s169 = scalar_select %p168, %s15, 1
      %s170 = smul.addr %s169, 32
      %s171 = smul.addr %s170, 4
      %s172 = scalar_lea.vmem %s0, %s171
      %p173 = pneg %p36
      %p174 = pneg %p33
      %p175 = pneg %p57
      %p176 = pneg %p54
      %p177 = pneg %p78
      %p178 = pneg %p75
      %p179 = pneg %p99
      %p180 = pneg %p96
      %p181 = pneg %p125
      %p182 = pneg %p122
      %p183 = scmp.lt.s32.totalorder %s15, 1
      %s184 = scalar_select %p183, %s15, 1
      %s185 = smul.addr %s184, 7
      %s186 = smul.addr %s185, 4
      %s187 = scalar_lea.vmem %s4, %s186
      %p188 = scmp.lt.s32.totalorder %s15, 1
      %s189 = scalar_select %p188, %s15, 1
      %s190 = smul.addr %s189, 32
      %s191 = smul.addr %s190, 4
      %s192 = scalar_lea.vmem %s0, %s191
      %p193 = scmp.lt.s32.totalorder %s15, 1
      %s194 = scalar_select %p193, %s15, 1
      %s195 = smul.addr %s194, 7
      %s196 = smul.addr %s195, 4
      %s197 = scalar_lea.vmem %s4, %s196
      %v199 = vld [vmem:[%s192] sm:$0xf]
      %v200 = vld [vmem:[%s192 + $0x4] sm:$0xf]
      %v201 = vld [vmem:[%s192 + $0x8] sm:$0xf]
      %v202 = vld [vmem:[%s192 + $0xc] sm:$0xf]
      %v203 = vld [vmem:[%s192 + $0x10] sm:$0xf]
      %v204 = vld [vmem:[%s192 + $0x14] sm:$0xf]
      %v205 = vld [vmem:[%s192 + $0x18] sm:$0xf]
      %v206 = vld [vmem:[%s192 + $0x1c] sm:$0xf]
      %v207 = vld [vmem:[%s192 + $0x20] sm:$0xf]
      %v208 = vld [vmem:[%s192 + $0x24] sm:$0xf]
      %v209 = vld [vmem:[%s192 + $0x28] sm:$0xf]
      %v210 = vld [vmem:[%s192 + $0x2c] sm:$0xf]
      %v211 = vld [vmem:[%s192 + $0x30] sm:$0xf]
      %v212 = vld [vmem:[%s192 + $0x34] sm:$0xf]
      %v213 = vld [vmem:[%s192 + $0x38] sm:$0xf]
      %v214 = vld [vmem:[%s192 + $0x3c] sm:$0xf]
      %v215 = vld [vmem:[%s192 + $0x40] sm:$0xf]
      %v216 = vld [vmem:[%s192 + $0x44] sm:$0xf]
      %v217 = vld [vmem:[%s192 + $0x48] sm:$0xf]
      %v218 = vld [vmem:[%s192 + $0x4c] sm:$0xf]
      %v219 = vld [vmem:[%s192 + $0x50] sm:$0xf]
      %v220 = vld [vmem:[%s192 + $0x54] sm:$0xf]
      %v221 = vld [vmem:[%s192 + $0x58] sm:$0xf]
      %v222 = vld [vmem:[%s192 + $0x5c] sm:$0xf]
      %v223 = vld [vmem:[%s192 + $0x60] sm:$0xf]
      %v224 = vld [vmem:[%s192 + $0x64] sm:$0xf]
      %v225 = vld [vmem:[%s192 + $0x68] sm:$0xf]
      %v226 = vld [vmem:[%s192 + $0x6c] sm:$0xf]
      %v227 = vld [vmem:[%s192 + $0x70] sm:$0xf]
      %v228 = vld [vmem:[%s192 + $0x74] sm:$0xf]
      %v229 = vld [vmem:[%s1] sm:$0x3]
      %s230 = scalar_lea.vmem %s1, 2
      %v231 = vld [vmem:[%s230] sm:$0x3]
      %v262 = vunpack.c.l.b16 %v199
      %v263 = vunpack.c.l.b16 %v200
      %v264 = vunpack.c.l.b16 %v201
      %v265 = vunpack.c.l.b16 %v202
      %v266 = vunpack.c.l.b16 %v203
      %v267 = vunpack.c.l.b16 %v204
      %v268 = vunpack.c.l.b16 %v205
      %v269 = vunpack.c.l.b16 %v206
      %v270 = vunpack.c.l.b16 %v207
      %v271 = vunpack.c.l.b16 %v208
      %v272 = vunpack.c.l.b16 %v209
      %v273 = vunpack.c.l.b16 %v210
      %v274 = vunpack.c.l.b16 %v211
      %v275 = vunpack.c.l.b16 %v212
      %v276 = vunpack.c.l.b16 %v213
      %v277 = vunpack.c.l.b16 %v214
      %v278 = vunpack.c.l.b16 %v215
      %v279 = vunpack.c.l.b16 %v216
      %v280 = vunpack.c.l.b16 %v217
      %v281 = vunpack.c.l.b16 %v218
      %v282 = vunpack.c.l.b16 %v219
      %v283 = vunpack.c.l.b16 %v220
      %v284 = vunpack.c.l.b16 %v221
      %v285 = vunpack.c.l.b16 %v222
      %v286 = vunpack.c.l.b16 %v223
      %v287 = vunpack.c.l.b16 %v224
      %v288 = vunpack.c.l.b16 %v225
      %v289 = vunpack.c.l.b16 %v226
      %v290 = vunpack.c.l.b16 %v227
      %v291 = vunpack.c.l.b16 %v228
      %v292 = vpack.c.b16 %v263, %v262
      %v293 = vpack.c.b16 %v265, %v264
      %v294 = vpack.c.b16 %v267, %v266
      %v295 = vpack.c.b16 %v269, %v268
      %v296 = vpack.c.b16 %v271, %v270
      %v297 = vpack.c.b16 %v273, %v272
      %v298 = vpack.c.b16 %v275, %v274
      %v299 = vpack.c.b16 %v277, %v276
      %v300 = vpack.c.b16 %v279, %v278
      %v301 = vpack.c.b16 %v281, %v280
      %v302 = vpack.c.b16 %v283, %v282
      %v303 = vpack.c.b16 %v285, %v284
      %v304 = vpack.c.b16 %v287, %v286
      %v305 = vpack.c.b16 %v289, %v288
      %v306 = vpack.c.b16 %v291, %v290
      %vm307 = vsmask.f32 7424
      %v309 = vshrl.u32 %v292, 16
      %v311 = vshll.u32 %v292, 16
      %v313 = vrot.slane %v311, 1
      %v314 = vor.u32 %v309, %v313
      %v316 = vshll.u32 %v293, 16
      %v318 = vrot.slane %v316, 1
      %v319 = vsel %vm307, %v314, %v318
      %v320 = vshrl.u32 %v293, 16
      %v322 = vor.u32 %v320, %v318
      %v324 = vshll.u32 %v294, 16
      %v326 = vrot.slane %v324, 1
      %v327 = vsel %vm307, %v322, %v326
      %v328 = vshrl.u32 %v294, 16
      %v330 = vor.u32 %v328, %v326
      %v332 = vshll.u32 %v295, 16
      %v334 = vrot.slane %v332, 1
      %v335 = vsel %vm307, %v330, %v334
      %v336 = vshrl.u32 %v295, 16
      %v338 = vor.u32 %v336, %v334
      %v340 = vshll.u32 %v296, 16
      %v342 = vrot.slane %v340, 1
      %v343 = vsel %vm307, %v338, %v342
      %v344 = vshrl.u32 %v296, 16
      %v346 = vor.u32 %v344, %v342
      %v348 = vshll.u32 %v297, 16
      %v350 = vrot.slane %v348, 1
      %v351 = vsel %vm307, %v346, %v350
      %v352 = vshrl.u32 %v297, 16
      %v354 = vor.u32 %v352, %v350
      %v356 = vshll.u32 %v298, 16
      %v358 = vrot.slane %v356, 1
      %v359 = vsel %vm307, %v354, %v358
      %v360 = vshrl.u32 %v298, 16
      %v362 = vor.u32 %v360, %v358
      %v364 = vshll.u32 %v299, 16
      %v366 = vrot.slane %v364, 1
      %v367 = vsel %vm307, %v362, %v366
      %v368 = vshrl.u32 %v299, 16
      %v370 = vor.u32 %v368, %v366
      %v372 = vshll.u32 %v300, 16
      %v374 = vrot.slane %v372, 1
      %v375 = vsel %vm307, %v370, %v374
      %v376 = vshrl.u32 %v300, 16
      %v378 = vor.u32 %v376, %v374
      %v380 = vshll.u32 %v301, 16
      %v382 = vrot.slane %v380, 1
      %v383 = vsel %vm307, %v378, %v382
      %v384 = vshrl.u32 %v301, 16
      %v386 = vor.u32 %v384, %v382
      %v388 = vshll.u32 %v302, 16
      %v390 = vrot.slane %v388, 1
      %v391 = vsel %vm307, %v386, %v390
      %v392 = vshrl.u32 %v302, 16
      %v394 = vor.u32 %v392, %v390
      %v396 = vshll.u32 %v303, 16
      %v398 = vrot.slane %v396, 1
      %v399 = vsel %vm307, %v394, %v398
      %v400 = vshrl.u32 %v303, 16
      %v402 = vor.u32 %v400, %v398
      %v404 = vshll.u32 %v304, 16
      %v406 = vrot.slane %v404, 1
      %v407 = vsel %vm307, %v402, %v406
      %v408 = vshrl.u32 %v304, 16
      %v410 = vor.u32 %v408, %v406
      %v412 = vshll.u32 %v305, 16
      %v414 = vrot.slane %v412, 1
      %v415 = vsel %vm307, %v410, %v414
      %v416 = vshrl.u32 %v305, 16
      %v418 = vor.u32 %v416, %v414
      %v420 = vshll.u32 %v306, 16
      %v422 = vrot.slane %v420, 1
      %v423 = vsel %vm307, %v418, %v422
      %v424 = vshrl.u32 %v306, 16
      %v426 = vor.u32 %v424, %v422
      %vm427 = vcmask 31744
      %v429 = vsel %vm427, %v319, 0
      %v432 = vsel %vm427, %v327, 0
      %v435 = vsel %vm427, %v335, 0
      %v438 = vsel %vm427, %v343, 0
      %v441 = vsel %vm427, %v351, 0
      %v444 = vsel %vm427, %v359, 0
      %v447 = vsel %vm427, %v367, 0
      %v450 = vsel %vm427, %v375, 0
      %v453 = vsel %vm427, %v383, 0
      %v456 = vsel %vm427, %v391, 0
      %v459 = vsel %vm427, %v399, 0
      %v462 = vsel %vm427, %v407, 0
      %v465 = vsel %vm427, %v415, 0
      %v468 = vsel %vm427, %v423, 0
      %v471 = vsel %vm427, %v426, 0
      %vm473 = vcmask 1041408
      %v475 = vsel %vm473, %v231, 0
      %477 = vmatprep.subr.bf16.mxu0 0
      %478 = vmatpush1.bf16.msra.mxu0 %v475
      %479 = vmatprep.subr.bf16.mxu0 0
      %480 = vmatpush1.bf16.msra.mxu0 0
      %481 = vmatprep.subr.bf16.mxu0 0
      %482 = vmatpush1.bf16.msra.mxu0 0
      %483 = vmatprep.subr.bf16.mxu0 0
      %484 = vmatpush1.bf16.msra.mxu0 0
      %485 = vmatprep.subr.bf16.mxu0 0
      %486 = vmatpush1.bf16.msra.mxu0 0
      %487 = vmatprep.subr.bf16.mxu0 0
      %488 = vmatpush1.bf16.msra.mxu0 0
      %489 = vmatprep.subr.bf16.mxu0 0
      %490 = vmatpush1.bf16.msra.mxu0 0
      %491 = vmatprep.subr.bf16.mxu0 0
      %492 = vmatpush1.bf16.msra.mxu0 0
      %493 = vmatprep.subr.bf16.mxu0 0
      %494 = vmatpush1.bf16.msra.mxu0 0
      %495 = vmatprep.subr.bf16.mxu0 0
      %496 = vmatpush1.bf16.msra.mxu0 0
      %497 = vmatprep.subr.bf16.mxu0 0
      %498 = vmatpush1.bf16.msra.mxu0 0
      %499 = vmatprep.subr.bf16.mxu0 0
      %500 = vmatpush1.bf16.msra.mxu0 0
      %501 = vmatprep.subr.bf16.mxu0 0
      %502 = vmatpush1.bf16.msra.mxu0 0
      %503 = vmatprep.subr.bf16.mxu0 0
      %504 = vmatpush1.bf16.msra.mxu0 0
      %505 = vmatprep.subr.bf16.mxu0 0
      %506 = vmatpush1.bf16.msra.mxu0 0
      %507 = vmatprep.subr.bf16.mxu0 0
      %508 = vmatpush1.bf16.msra.mxu0 0
      %509 = vmatprep.mubr.bf16.mxu0 0
      %510 = vmatmul.mubr.bf16.gmra.mrb[0].mxu0 %v429
      %v511 = vpop.f32.mrb[0].mxu0
      %v512 = vadd.f32 0.0, %v511
      %v513 = vpop.f32.mrb[0].mxu0
      %v514 = vpop.f32.mrb[0].mxu0
      %v515 = vadd.f32 0.0, %v514
      %v516 = vpop.f32.mrb[0].mxu0
      %517 = vmatprep.mubr.bf16.mxu0 0
      %518 = vmatmul.mubr.bf16.gmra.mrb[0].mxu0 %v432
      %v519 = vpop.f32.mrb[0].mxu0
      %v520 = vadd.f32 0.0, %v519
      %v521 = vpop.f32.mrb[0].mxu0
      %v522 = vpop.f32.mrb[0].mxu0
      %v523 = vadd.f32 0.0, %v522
      %v524 = vpop.f32.mrb[0].mxu0
      %525 = vmatprep.mubr.bf16.mxu0 0
      %526 = vmatmul.mubr.bf16.gmra.mrb[0].mxu0 %v435
      %v527 = vpop.f32.mrb[0].mxu0
      %v528 = vadd.f32 0.0, %v527
      %v529 = vpop.f32.mrb[0].mxu0
      %v530 = vpop.f32.mrb[0].mxu0
      %v531 = vadd.f32 0.0, %v530
      %v532 = vpop.f32.mrb[0].mxu0
      %533 = vmatprep.mubr.bf16.mxu0 0
      %534 = vmatmul.mubr.bf16.gmra.mrb[0].mxu0 %v438
      %v535 = vpop.f32.mrb[0].mxu0
      %v536 = vadd.f32 0.0, %v535
      %v537 = vpop.f32.mrb[0].mxu0
      %v538 = vpop.f32.mrb[0].mxu0
      %v539 = vadd.f32 0.0, %v538
      %v540 = vpop.f32.mrb[0].mxu0
      %541 = vmatprep.mubr.bf16.mxu0 0
      %542 = vmatmul.mubr.bf16.gmra.mrb[0].mxu0 %v441
      %v543 = vpop.f32.mrb[0].mxu0
      %v544 = vadd.f32 0.0, %v543
      %v545 = vpop.f32.mrb[0].mxu0
      %v546 = vpop.f32.mrb[0].mxu0
      %v547 = vadd.f32 0.0, %v546
      %v548 = vpop.f32.mrb[0].mxu0
      %549 = vmatprep.mubr.bf16.mxu0 0
      %550 = vmatmul.mubr.bf16.gmra.mrb[0].mxu0 %v444
      %v551 = vpop.f32.mrb[0].mxu0
      %v552 = vadd.f32 0.0, %v551
      %v553 = vpop.f32.mrb[0].mxu0
      %v554 = vpop.f32.mrb[0].mxu0
      %v555 = vadd.f32 0.0, %v554
      %v556 = vpop.f32.mrb[0].mxu0
      %557 = vmatprep.mubr.bf16.mxu0 0
      %558 = vmatmul.mubr.bf16.gmra.mrb[0].mxu0 %v447
      %v559 = vpop.f32.mrb[0].mxu0
      %v560 = vadd.f32 0.0, %v559
      %v561 = vpop.f32.mrb[0].mxu0
      %v562 = vpop.f32.mrb[0].mxu0
      %v563 = vadd.f32 0.0, %v562
      %v564 = vpop.f32.mrb[0].mxu0
      %565 = vmatprep.mubr.bf16.mxu0 0
      %566 = vmatmul.mubr.bf16.gmra.mrb[0].mxu0 %v450
      %v567 = vpop.f32.mrb[0].mxu0
      %v568 = vadd.f32 0.0, %v567
      %v569 = vpop.f32.mrb[0].mxu0
      %v570 = vpop.f32.mrb[0].mxu0
      %v571 = vadd.f32 0.0, %v570
      %v572 = vpop.f32.mrb[0].mxu0
      %573 = vmatprep.mubr.bf16.mxu0 0
      %574 = vmatmul.mubr.bf16.gmra.mrb[0].mxu0 %v453
      %v575 = vpop.f32.mrb[0].mxu0
      %v576 = vadd.f32 0.0, %v575
      %v577 = vpop.f32.mrb[0].mxu0
      %v578 = vpop.f32.mrb[0].mxu0
      %v579 = vadd.f32 0.0, %v578
      %v580 = vpop.f32.mrb[0].mxu0
      %581 = vmatprep.mubr.bf16.mxu0 0
      %582 = vmatmul.mubr.bf16.gmra.mrb[0].mxu0 %v456
      %v583 = vpop.f32.mrb[0].mxu0
      %v584 = vadd.f32 0.0, %v583
      %v585 = vpop.f32.mrb[0].mxu0
      %v586 = vpop.f32.mrb[0].mxu0
      %v587 = vadd.f32 0.0, %v586
      %v588 = vpop.f32.mrb[0].mxu0
      %589 = vmatprep.mubr.bf16.mxu0 0
      %590 = vmatmul.mubr.bf16.gmra.mrb[0].mxu0 %v459
      %v591 = vpop.f32.mrb[0].mxu0
      %v592 = vadd.f32 0.0, %v591
      %v593 = vpop.f32.mrb[0].mxu0
      %v594 = vpop.f32.mrb[0].mxu0
      %v595 = vadd.f32 0.0, %v594
      %v596 = vpop.f32.mrb[0].mxu0
      %597 = vmatprep.mubr.bf16.mxu0 0
      %598 = vmatmul.mubr.bf16.gmra.mrb[0].mxu0 %v462
      %v599 = vpop.f32.mrb[0].mxu0
      %v600 = vadd.f32 0.0, %v599
      %v601 = vpop.f32.mrb[0].mxu0
      %v602 = vpop.f32.mrb[0].mxu0
      %v603 = vadd.f32 0.0, %v602
      %v604 = vpop.f32.mrb[0].mxu0
      %605 = vmatprep.mubr.bf16.mxu0 0
      %606 = vmatmul.mubr.bf16.gmra.mrb[0].mxu0 %v465
      %v607 = vpop.f32.mrb[0].mxu0
      %v608 = vadd.f32 0.0, %v607
      %v609 = vpop.f32.mrb[0].mxu0
      %v610 = vpop.f32.mrb[0].mxu0
      %v611 = vadd.f32 0.0, %v610
      %v612 = vpop.f32.mrb[0].mxu0
      %613 = vmatprep.mubr.bf16.mxu0 0
      %614 = vmatmul.mubr.bf16.gmra.mrb[0].mxu0 %v468
      %v615 = vpop.f32.mrb[0].mxu0
      %v616 = vadd.f32 0.0, %v615
      %v617 = vpop.f32.mrb[0].mxu0
      %v618 = vpop.f32.mrb[0].mxu0
      %v619 = vadd.f32 0.0, %v618
      %v620 = vpop.f32.mrb[0].mxu0
      %621 = vmatprep.mubr.bf16.mxu0 0
      %622 = vmatmul.mubr.bf16.gmra.mrb[0].mxu0 %v471
      %v623 = vpop.f32.mrb[0].mxu0
      %v624 = vadd.f32 0.0, %v623
      %v625 = vpop.f32.mrb[0].mxu0
      %v626 = vpop.f32.mrb[0].mxu0
      %v627 = vadd.f32 0.0, %v626
      %v628 = vpop.f32.mrb[0].mxu0
      %629 = vdwg.mxu0
      %v630 = vsel %vm427, %v292, 0
      %v632 = vsel %vm427, %v293, 0
      %v634 = vsel %vm427, %v294, 0
      %v636 = vsel %vm427, %v295, 0
      %v638 = vsel %vm427, %v296, 0
      %v640 = vsel %vm427, %v297, 0
      %v642 = vsel %vm427, %v298, 0
      %v644 = vsel %vm427, %v299, 0
      %v646 = vsel %vm427, %v300, 0
      %v648 = vsel %vm427, %v301, 0
      %v650 = vsel %vm427, %v302, 0
      %v652 = vsel %vm427, %v303, 0
      %v654 = vsel %vm427, %v304, 0
      %v656 = vsel %vm427, %v305, 0
      %v658 = vsel %vm427, %v306, 0
      %v661 = vsel %vm473, %v229, 0
      %663 = vmatprep.subr.bf16.mxu0 0
      %664 = vmatpush1.bf16.msra.mxu0 %v661
      %665 = vmatprep.subr.bf16.mxu0 0
      %666 = vmatpush1.bf16.msra.mxu0 0
      %667 = vmatprep.subr.bf16.mxu0 0
      %668 = vmatpush1.bf16.msra.mxu0 0
      %669 = vmatprep.subr.bf16.mxu0 0
      %670 = vmatpush1.bf16.msra.mxu0 0
      %671 = vmatprep.subr.bf16.mxu0 0
      %672 = vmatpush1.bf16.msra.mxu0 0
      %673 = vmatprep.subr.bf16.mxu0 0
      %674 = vmatpush1.bf16.msra.mxu0 0
      %675 = vmatprep.subr.bf16.mxu0 0
      %676 = vmatpush1.bf16.msra.mxu0 0
      %677 = vmatprep.subr.bf16.mxu0 0
      %678 = vmatpush1.bf16.msra.mxu0 0
      %679 = vmatprep.subr.bf16.mxu0 0
      %680 = vmatpush1.bf16.msra.mxu0 0
      %681 = vmatprep.subr.bf16.mxu0 0
      %682 = vmatpush1.bf16.msra.mxu0 0
      %683 = vmatprep.subr.bf16.mxu0 0
      %684 = vmatpush1.bf16.msra.mxu0 0
      %685 = vmatprep.subr.bf16.mxu0 0
      %686 = vmatpush1.bf16.msra.mxu0 0
      %687 = vmatprep.subr.bf16.mxu0 0
      %688 = vmatpush1.bf16.msra.mxu0 0
      %689 = vmatprep.subr.bf16.mxu0 0
      %690 = vmatpush1.bf16.msra.mxu0 0
      %691 = vmatprep.subr.bf16.mxu0 0
      %692 = vmatpush1.bf16.msra.mxu0 0
      %693 = vmatprep.subr.bf16.mxu0 0
      %694 = vmatpush1.bf16.msra.mxu0 0
      %695 = vmatprep.mubr.bf16.mxu0 0
      %696 = vmatmul.mubr.bf16.gmra.mrb[0].mxu0 %v630
      %v697 = vpop.f32.mrb[0].mxu0
      %v698 = vadd.f32 %v512, %v697
      %v699 = vpop.f32.mrb[0].mxu0
      %v700 = vpop.f32.mrb[0].mxu0
      %v701 = vadd.f32 %v515, %v700
      %v702 = vpop.f32.mrb[0].mxu0
      %703 = vmatprep.mubr.bf16.mxu0 0
      %704 = vmatmul.mubr.bf16.gmra.mrb[0].mxu0 %v632
      %v705 = vpop.f32.mrb[0].mxu0
      %v706 = vadd.f32 %v520, %v705
      %v707 = vpop.f32.mrb[0].mxu0
      %v708 = vpop.f32.mrb[0].mxu0
      %v709 = vadd.f32 %v523, %v708
      %v710 = vpop.f32.mrb[0].mxu0
      %711 = vmatprep.mubr.bf16.mxu0 0
      %712 = vmatmul.mubr.bf16.gmra.mrb[0].mxu0 %v634
      %v713 = vpop.f32.mrb[0].mxu0
      %v714 = vadd.f32 %v528, %v713
      %v715 = vpop.f32.mrb[0].mxu0
      %v716 = vpop.f32.mrb[0].mxu0
      %v717 = vadd.f32 %v531, %v716
      %v718 = vpop.f32.mrb[0].mxu0
      %719 = vmatprep.mubr.bf16.mxu0 0
      %720 = vmatmul.mubr.bf16.gmra.mrb[0].mxu0 %v636
      %v721 = vpop.f32.mrb[0].mxu0
      %v722 = vadd.f32 %v536, %v721
      %v723 = vpop.f32.mrb[0].mxu0
      %v724 = vpop.f32.mrb[0].mxu0
      %v725 = vadd.f32 %v539, %v724
      %v726 = vpop.f32.mrb[0].mxu0
      %727 = vmatprep.mubr.bf16.mxu0 0
      %728 = vmatmul.mubr.bf16.gmra.mrb[0].mxu0 %v638
      %v729 = vpop.f32.mrb[0].mxu0
      %v730 = vadd.f32 %v544, %v729
      %v731 = vpop.f32.mrb[0].mxu0
      %v732 = vpop.f32.mrb[0].mxu0
      %v733 = vadd.f32 %v547, %v732
      %v734 = vpop.f32.mrb[0].mxu0
      %735 = vmatprep.mubr.bf16.mxu0 0
      %736 = vmatmul.mubr.bf16.gmra.mrb[0].mxu0 %v640
      %v737 = vpop.f32.mrb[0].mxu0
      %v738 = vadd.f32 %v552, %v737
      %v739 = vpop.f32.mrb[0].mxu0
      %v740 = vpop.f32.mrb[0].mxu0
      %v741 = vadd.f32 %v555, %v740
      %v742 = vpop.f32.mrb[0].mxu0
      %743 = vmatprep.mubr.bf16.mxu0 0
      %744 = vmatmul.mubr.bf16.gmra.mrb[0].mxu0 %v642
      %v745 = vpop.f32.mrb[0].mxu0
      %v746 = vadd.f32 %v560, %v745
      %v747 = vpop.f32.mrb[0].mxu0
      %v748 = vpop.f32.mrb[0].mxu0
      %v749 = vadd.f32 %v563, %v748
      %v750 = vpop.f32.mrb[0].mxu0
      %751 = vmatprep.mubr.bf16.mxu0 0
      %752 = vmatmul.mubr.bf16.gmra.mrb[0].mxu0 %v644
      %v753 = vpop.f32.mrb[0].mxu0
      %v754 = vadd.f32 %v568, %v753
      %v755 = vpop.f32.mrb[0].mxu0
      %v756 = vpop.f32.mrb[0].mxu0
      %v757 = vadd.f32 %v571, %v756
      %v758 = vpop.f32.mrb[0].mxu0
      %759 = vmatprep.mubr.bf16.mxu0 0
      %760 = vmatmul.mubr.bf16.gmra.mrb[0].mxu0 %v646
      %v761 = vpop.f32.mrb[0].mxu0
      %v762 = vadd.f32 %v576, %v761
      %v763 = vpop.f32.mrb[0].mxu0
      %v764 = vpop.f32.mrb[0].mxu0
      %v765 = vadd.f32 %v579, %v764
      %v766 = vpop.f32.mrb[0].mxu0
      %767 = vmatprep.mubr.bf16.mxu0 0
      %768 = vmatmul.mubr.bf16.gmra.mrb[0].mxu0 %v648
      %v769 = vpop.f32.mrb[0].mxu0
      %v770 = vadd.f32 %v584, %v769
      %v771 = vpop.f32.mrb[0].mxu0
      %v772 = vpop.f32.mrb[0].mxu0
      %v773 = vadd.f32 %v587, %v772
      %v774 = vpop.f32.mrb[0].mxu0
      %775 = vmatprep.mubr.bf16.mxu0 0
      %776 = vmatmul.mubr.bf16.gmra.mrb[0].mxu0 %v650
      %v777 = vpop.f32.mrb[0].mxu0
      %v778 = vadd.f32 %v592, %v777
      %v779 = vpop.f32.mrb[0].mxu0
      %v780 = vpop.f32.mrb[0].mxu0
      %v781 = vadd.f32 %v595, %v780
      %v782 = vpop.f32.mrb[0].mxu0
      %783 = vmatprep.mubr.bf16.mxu0 0
      %784 = vmatmul.mubr.bf16.gmra.mrb[0].mxu0 %v652
      %v785 = vpop.f32.mrb[0].mxu0
      %v786 = vadd.f32 %v600, %v785
      %v787 = vpop.f32.mrb[0].mxu0
      %v788 = vpop.f32.mrb[0].mxu0
      %v789 = vadd.f32 %v603, %v788
      %v790 = vpop.f32.mrb[0].mxu0
      %791 = vmatprep.mubr.bf16.mxu0 0
      %792 = vmatmul.mubr.bf16.gmra.mrb[0].mxu0 %v654
      %v793 = vpop.f32.mrb[0].mxu0
      %v794 = vadd.f32 %v608, %v793
      %v795 = vpop.f32.mrb[0].mxu0
      %v796 = vpop.f32.mrb[0].mxu0
      %v797 = vadd.f32 %v611, %v796
      %v798 = vpop.f32.mrb[0].mxu0
      %799 = vmatprep.mubr.bf16.mxu0 0
      %800 = vmatmul.mubr.bf16.gmra.mrb[0].mxu0 %v656
      %v801 = vpop.f32.mrb[0].mxu0
      %v802 = vadd.f32 %v616, %v801
      %v803 = vpop.f32.mrb[0].mxu0
      %v804 = vpop.f32.mrb[0].mxu0
      %v805 = vadd.f32 %v619, %v804
      %v806 = vpop.f32.mrb[0].mxu0
      %807 = vmatprep.mubr.bf16.mxu0 0
      %808 = vmatmul.mubr.bf16.gmra.mrb[0].mxu0 %v658
      %v809 = vpop.f32.mrb[0].mxu0
      %v810 = vadd.f32 %v624, %v809
      %v811 = vpop.f32.mrb[0].mxu0
      %v812 = vpop.f32.mrb[0].mxu0
      %v813 = vadd.f32 %v627, %v812
      %v814 = vpop.f32.mrb[0].mxu0
      %815 = vdwg.mxu0
      %v816 = vld [vmem:[%s192 + $0x8] sm:$0xf]
      %v817 = vld [vmem:[%s192 + $0xc] sm:$0xf]
      %v818 = vld [vmem:[%s192 + $0x10] sm:$0xf]
      %v819 = vld [vmem:[%s192 + $0x14] sm:$0xf]
      %v820 = vld [vmem:[%s192 + $0x18] sm:$0xf]
      %v821 = vld [vmem:[%s192 + $0x1c] sm:$0xf]
      %v822 = vld [vmem:[%s192 + $0x20] sm:$0xf]
      %v823 = vld [vmem:[%s192 + $0x24] sm:$0xf]
      %v824 = vld [vmem:[%s192 + $0x28] sm:$0xf]
      %v825 = vld [vmem:[%s192 + $0x2c] sm:$0xf]
      %v826 = vld [vmem:[%s192 + $0x30] sm:$0xf]
      %v827 = vld [vmem:[%s192 + $0x34] sm:$0xf]
      %v828 = vld [vmem:[%s192 + $0x38] sm:$0xf]
      %v829 = vld [vmem:[%s192 + $0x3c] sm:$0xf]
      %v830 = vld [vmem:[%s192 + $0x40] sm:$0xf]
      %v831 = vld [vmem:[%s192 + $0x44] sm:$0xf]
      %v832 = vld [vmem:[%s192 + $0x48] sm:$0xf]
      %v833 = vld [vmem:[%s192 + $0x4c] sm:$0xf]
      %v834 = vld [vmem:[%s192 + $0x50] sm:$0xf]
      %v835 = vld [vmem:[%s192 + $0x54] sm:$0xf]
      %v836 = vld [vmem:[%s192 + $0x58] sm:$0xf]
      %v837 = vld [vmem:[%s192 + $0x5c] sm:$0xf]
      %v838 = vld [vmem:[%s192 + $0x60] sm:$0xf]
      %v839 = vld [vmem:[%s192 + $0x64] sm:$0xf]
      %v840 = vld [vmem:[%s192 + $0x68] sm:$0xf]
      %v841 = vld [vmem:[%s192 + $0x6c] sm:$0xf]
      %v842 = vld [vmem:[%s192 + $0x70] sm:$0xf]
      %v843 = vld [vmem:[%s192 + $0x74] sm:$0xf]
      %v844 = vld [vmem:[%s192 + $0x78] sm:$0xf]
      %v845 = vld [vmem:[%s192 + $0x7c] sm:$0xf]
      %s846 = scalar_lea.vmem %s1, 4
      %v847 = vld [vmem:[%s846] sm:$0x3]
      %v878 = vunpack.c.l.b16 %v816
      %v879 = vunpack.c.l.b16 %v817
      %v880 = vunpack.c.l.b16 %v818
      %v881 = vunpack.c.l.b16 %v819
      %v882 = vunpack.c.l.b16 %v820
      %v883 = vunpack.c.l.b16 %v821
      %v884 = vunpack.c.l.b16 %v822
      %v885 = vunpack.c.l.b16 %v823
      %v886 = vunpack.c.l.b16 %v824
      %v887 = vunpack.c.l.b16 %v825
      %v888 = vunpack.c.l.b16 %v826
      %v889 = vunpack.c.l.b16 %v827
      %v890 = vunpack.c.l.b16 %v828
      %v891 = vunpack.c.l.b16 %v829
      %v892 = vunpack.c.l.b16 %v830
      %v893 = vunpack.c.l.b16 %v831
      %v894 = vunpack.c.l.b16 %v832
      %v895 = vunpack.c.l.b16 %v833
      %v896 = vunpack.c.l.b16 %v834
      %v897 = vunpack.c.l.b16 %v835
      %v898 = vunpack.c.l.b16 %v836
      %v899 = vunpack.c.l.b16 %v837
      %v900 = vunpack.c.l.b16 %v838
      %v901 = vunpack.c.l.b16 %v839
      %v902 = vunpack.c.l.b16 %v840
      %v903 = vunpack.c.l.b16 %v841
      %v904 = vunpack.c.l.b16 %v842
      %v905 = vunpack.c.l.b16 %v843
      %v906 = vunpack.c.l.b16 %v844
      %v907 = vunpack.c.l.b16 %v845
      %v908 = vpack.c.b16 %v879, %v878
      %v909 = vpack.c.b16 %v881, %v880
      %v910 = vpack.c.b16 %v883, %v882
      %v911 = vpack.c.b16 %v885, %v884
      %v912 = vpack.c.b16 %v887, %v886
      %v913 = vpack.c.b16 %v889, %v888
      %v914 = vpack.c.b16 %v891, %v890
      %v915 = vpack.c.b16 %v893, %v892
      %v916 = vpack.c.b16 %v895, %v894
      %v917 = vpack.c.b16 %v897, %v896
      %v918 = vpack.c.b16 %v899, %v898
      %v919 = vpack.c.b16 %v901, %v900
      %v920 = vpack.c.b16 %v903, %v902
      %v921 = vpack.c.b16 %v905, %v904
      %v922 = vpack.c.b16 %v907, %v906
      %v924 = vsel %vm427, %v908, 0
      %v927 = vsel %vm427, %v909, 0
      %v930 = vsel %vm427, %v910, 0
      %v933 = vsel %vm427, %v911, 0
      %v936 = vsel %vm427, %v912, 0
      %v939 = vsel %vm427, %v913, 0
      %v942 = vsel %vm427, %v914, 0
      %v945 = vsel %vm427, %v915, 0
      %v948 = vsel %vm427, %v916, 0
      %v951 = vsel %vm427, %v917, 0
      %v954 = vsel %vm427, %v918, 0
      %v957 = vsel %vm427, %v919, 0
      %v960 = vsel %vm427, %v920, 0
      %v963 = vsel %vm427, %v921, 0
      %v966 = vsel %vm427, %v922, 0
      %v969 = vsel %vm473, %v847, 0
      %971 = vmatprep.subr.bf16.mxu0 0
      %972 = vmatpush1.bf16.msra.mxu0 %v969
      %973 = vmatprep.subr.bf16.mxu0 0
      %974 = vmatpush1.bf16.msra.mxu0 0
      %975 = vmatprep.subr.bf16.mxu0 0
      %976 = vmatpush1.bf16.msra.mxu0 0
      %977 = vmatprep.subr.bf16.mxu0 0
      %978 = vmatpush1.bf16.msra.mxu0 0
      %979 = vmatprep.subr.bf16.mxu0 0
      %980 = vmatpush1.bf16.msra.mxu0 0
      %981 = vmatprep.subr.bf16.mxu0 0
      %982 = vmatpush1.bf16.msra.mxu0 0
      %983 = vmatprep.subr.bf16.mxu0 0
      %984 = vmatpush1.bf16.msra.mxu0 0
      %985 = vmatprep.subr.bf16.mxu0 0
      %986 = vmatpush1.bf16.msra.mxu0 0
      %987 = vmatprep.subr.bf16.mxu0 0
      %988 = vmatpush1.bf16.msra.mxu0 0
      %989 = vmatprep.subr.bf16.mxu0 0
      %990 = vmatpush1.bf16.msra.mxu0 0
      %991 = vmatprep.subr.bf16.mxu0 0
      %992 = vmatpush1.bf16.msra.mxu0 0
      %993 = vmatprep.subr.bf16.mxu0 0
      %994 = vmatpush1.bf16.msra.mxu0 0
      %995 = vmatprep.subr.bf16.mxu0 0
      %996 = vmatpush1.bf16.msra.mxu0 0
      %997 = vmatprep.subr.bf16.mxu0 0
      %998 = vmatpush1.bf16.msra.mxu0 0
      %999 = vmatprep.subr.bf16.mxu0 0
      %1000 = vmatpush1.bf16.msra.mxu0 0
      %1001 = vmatprep.subr.bf16.mxu0 0
      %1002 = vmatpush1.bf16.msra.mxu0 0
      %1003 = vmatprep.mubr.bf16.mxu0 0
      %1004 = vmatmul.mubr.bf16.gmra.mrb[0].mxu0 %v924
      %v1005 = vpop.f32.mrb[0].mxu0
      %v1006 = vadd.f32 0.0, %v1005
      %v1007 = vpop.f32.mrb[0].mxu0
      %v1008 = vpop.f32.mrb[0].mxu0
      %v1009 = vadd.f32 0.0, %v1008
      %v1010 = vpop.f32.mrb[0].mxu0
      %1011 = vmatprep.mubr.bf16.mxu0 0
      %1012 = vmatmul.mubr.bf16.gmra.mrb[0].mxu0 %v927
      %v1013 = vpop.f32.mrb[0].mxu0
      %v1014 = vadd.f32 0.0, %v1013
      %v1015 = vpop.f32.mrb[0].mxu0
      %v1016 = vpop.f32.mrb[0].mxu0
      %v1017 = vadd.f32 0.0, %v1016
      %v1018 = vpop.f32.mrb[0].mxu0
      %1019 = vmatprep.mubr.bf16.mxu0 0
      %1020 = vmatmul.mubr.bf16.gmra.mrb[0].mxu0 %v930
      %v1021 = vpop.f32.mrb[0].mxu0
      %v1022 = vadd.f32 0.0, %v1021
      %v1023 = vpop.f32.mrb[0].mxu0
      %v1024 = vpop.f32.mrb[0].mxu0
      %v1025 = vadd.f32 0.0, %v1024
      %v1026 = vpop.f32.mrb[0].mxu0
      %1027 = vmatprep.mubr.bf16.mxu0 0
      %1028 = vmatmul.mubr.bf16.gmra.mrb[0].mxu0 %v933
      %v1029 = vpop.f32.mrb[0].mxu0
      %v1030 = vadd.f32 0.0, %v1029
      %v1031 = vpop.f32.mrb[0].mxu0
      %v1032 = vpop.f32.mrb[0].mxu0
      %v1033 = vadd.f32 0.0, %v1032
      %v1034 = vpop.f32.mrb[0].mxu0
      %1035 = vmatprep.mubr.bf16.mxu0 0
      %1036 = vmatmul.mubr.bf16.gmra.mrb[0].mxu0 %v936
      %v1037 = vpop.f32.mrb[0].mxu0
      %v1038 = vadd.f32 0.0, %v1037
      %v1039 = vpop.f32.mrb[0].mxu0
      %v1040 = vpop.f32.mrb[0].mxu0
      %v1041 = vadd.f32 0.0, %v1040
      %v1042 = vpop.f32.mrb[0].mxu0
      %1043 = vmatprep.mubr.bf16.mxu0 0
      %1044 = vmatmul.mubr.bf16.gmra.mrb[0].mxu0 %v939
      %v1045 = vpop.f32.mrb[0].mxu0
      %v1046 = vadd.f32 0.0, %v1045
      %v1047 = vpop.f32.mrb[0].mxu0
      %v1048 = vpop.f32.mrb[0].mxu0
      %v1049 = vadd.f32 0.0, %v1048
      %v1050 = vpop.f32.mrb[0].mxu0
      %1051 = vmatprep.mubr.bf16.mxu0 0
      %1052 = vmatmul.mubr.bf16.gmra.mrb[0].mxu0 %v942
      %v1053 = vpop.f32.mrb[0].mxu0
      %v1054 = vadd.f32 0.0, %v1053
      %v1055 = vpop.f32.mrb[0].mxu0
      %v1056 = vpop.f32.mrb[0].mxu0
      %v1057 = vadd.f32 0.0, %v1056
      %v1058 = vpop.f32.mrb[0].mxu0
      %1059 = vmatprep.mubr.bf16.mxu0 0
      %1060 = vmatmul.mubr.bf16.gmra.mrb[0].mxu0 %v945
      %v1061 = vpop.f32.mrb[0].mxu0
      %v1062 = vadd.f32 0.0, %v1061
      %v1063 = vpop.f32.mrb[0].mxu0
      %v1064 = vpop.f32.mrb[0].mxu0
      %v1065 = vadd.f32 0.0, %v1064
      %v1066 = vpop.f32.mrb[0].mxu0
      %1067 = vmatprep.mubr.bf16.mxu0 0
      %1068 = vmatmul.mubr.bf16.gmra.mrb[0].mxu0 %v948
      %v1069 = vpop.f32.mrb[0].mxu0
      %v1070 = vadd.f32 0.0, %v1069
      %v1071 = vpop.f32.mrb[0].mxu0
      %v1072 = vpop.f32.mrb[0].mxu0
      %v1073 = vadd.f32 0.0, %v1072
      %v1074 = vpop.f32.mrb[0].mxu0
      %1075 = vmatprep.mubr.bf16.mxu0 0
      %1076 = vmatmul.mubr.bf16.gmra.mrb[0].mxu0 %v951
      %v1077 = vpop.f32.mrb[0].mxu0
      %v1078 = vadd.f32 0.0, %v1077
      %v1079 = vpop.f32.mrb[0].mxu0
      %v1080 = vpop.f32.mrb[0].mxu0
      %v1081 = vadd.f32 0.0, %v1080
      %v1082 = vpop.f32.mrb[0].mxu0
      %1083 = vmatprep.mubr.bf16.mxu0 0
      %1084 = vmatmul.mubr.bf16.gmra.mrb[0].mxu0 %v954
      %v1085 = vpop.f32.mrb[0].mxu0
      %v1086 = vadd.f32 0.0, %v1085
      %v1087 = vpop.f32.mrb[0].mxu0
      %v1088 = vpop.f32.mrb[0].mxu0
      %v1089 = vadd.f32 0.0, %v1088
      %v1090 = vpop.f32.mrb[0].mxu0
      %1091 = vmatprep.mubr.bf16.mxu0 0
      %1092 = vmatmul.mubr.bf16.gmra.mrb[0].mxu0 %v957
      %v1093 = vpop.f32.mrb[0].mxu0
      %v1094 = vadd.f32 0.0, %v1093
      %v1095 = vpop.f32.mrb[0].mxu0
      %v1096 = vpop.f32.mrb[0].mxu0
      %v1097 = vadd.f32 0.0, %v1096
      %v1098 = vpop.f32.mrb[0].mxu0
      %1099 = vmatprep.mubr.bf16.mxu0 0
      %1100 = vmatmul.mubr.bf16.gmra.mrb[0].mxu0 %v960
      %v1101 = vpop.f32.mrb[0].mxu0
      %v1102 = vadd.f32 0.0, %v1101
      %v1103 = vpop.f32.mrb[0].mxu0
      %v1104 = vpop.f32.mrb[0].mxu0
      %v1105 = vadd.f32 0.0, %v1104
      %v1106 = vpop.f32.mrb[0].mxu0
      %1107 = vmatprep.mubr.bf16.mxu0 0
      %1108 = vmatmul.mubr.bf16.gmra.mrb[0].mxu0 %v963
      %v1109 = vpop.f32.mrb[0].mxu0
      %v1110 = vadd.f32 0.0, %v1109
      %v1111 = vpop.f32.mrb[0].mxu0
      %v1112 = vpop.f32.mrb[0].mxu0
      %v1113 = vadd.f32 0.0, %v1112
      %v1114 = vpop.f32.mrb[0].mxu0
      %1115 = vmatprep.mubr.bf16.mxu0 0
      %1116 = vmatmul.mubr.bf16.gmra.mrb[0].mxu0 %v966
      %v1117 = vpop.f32.mrb[0].mxu0
      %v1118 = vadd.f32 0.0, %v1117
      %v1119 = vpop.f32.mrb[0].mxu0
      %v1120 = vpop.f32.mrb[0].mxu0
      %v1121 = vadd.f32 0.0, %v1120
      %v1122 = vpop.f32.mrb[0].mxu0
      %1123 = vdwg.mxu0
      %v1124 = vadd.f32 %v698, %v1006
      %v1125 = vadd.f32 %v701, %v1009
      %v1126 = vadd.f32 %v706, %v1014
      %v1127 = vadd.f32 %v709, %v1017
      %v1128 = vadd.f32 %v714, %v1022
      %v1129 = vadd.f32 %v717, %v1025
      %v1130 = vadd.f32 %v722, %v1030
      %v1131 = vadd.f32 %v725, %v1033
      %v1132 = vadd.f32 %v730, %v1038
      %v1133 = vadd.f32 %v733, %v1041
      %v1134 = vadd.f32 %v738, %v1046
      %v1135 = vadd.f32 %v741, %v1049
      %v1136 = vadd.f32 %v746, %v1054
      %v1137 = vadd.f32 %v749, %v1057
      %v1138 = vadd.f32 %v754, %v1062
      %v1139 = vadd.f32 %v757, %v1065
      %v1140 = vadd.f32 %v762, %v1070
      %v1141 = vadd.f32 %v765, %v1073
      %v1142 = vadd.f32 %v770, %v1078
      %v1143 = vadd.f32 %v773, %v1081
      %v1144 = vadd.f32 %v778, %v1086
      %v1145 = vadd.f32 %v781, %v1089
      %v1146 = vadd.f32 %v786, %v1094
      %v1147 = vadd.f32 %v789, %v1097
      %v1148 = vadd.f32 %v794, %v1102
      %v1149 = vadd.f32 %v797, %v1105
      %v1150 = vadd.f32 %v802, %v1110
      %v1151 = vadd.f32 %v805, %v1113
      %v1152 = vadd.f32 %v810, %v1118
      %v1153 = vadd.f32 %v813, %v1121
      %s1154 = scalar_lea.vmem %s1, 6
      %v1155 = vld [vmem:[%s1154] sm:$0x3]
      %v1156 = vshrl.u32 %v908, 16
      %v1158 = vshll.u32 %v908, 16
      %v1160 = vrot.slane %v1158, 1
      %v1161 = vor.u32 %v1156, %v1160
      %v1162 = vshll.u32 %v909, 16
      %v1164 = vrot.slane %v1162, 1
      %v1165 = vsel %vm307, %v1161, %v1164
      %v1166 = vshrl.u32 %v909, 16
      %v1168 = vor.u32 %v1166, %v1164
      %v1169 = vshll.u32 %v910, 16
      %v1171 = vrot.slane %v1169, 1
      %v1172 = vsel %vm307, %v1168, %v1171
      %v1173 = vshrl.u32 %v910, 16
      %v1175 = vor.u32 %v1173, %v1171
      %v1176 = vshll.u32 %v911, 16
      %v1178 = vrot.slane %v1176, 1
      %v1179 = vsel %vm307, %v1175, %v1178
      %v1180 = vshrl.u32 %v911, 16
      %v1182 = vor.u32 %v1180, %v1178
      %v1183 = vshll.u32 %v912, 16
      %v1185 = vrot.slane %v1183, 1
      %v1186 = vsel %vm307, %v1182, %v1185
      %v1187 = vshrl.u32 %v912, 16
      %v1189 = vor.u32 %v1187, %v1185
      %v1190 = vshll.u32 %v913, 16
      %v1192 = vrot.slane %v1190, 1
      %v1193 = vsel %vm307, %v1189, %v1192
      %v1194 = vshrl.u32 %v913, 16
      %v1196 = vor.u32 %v1194, %v1192
      %v1197 = vshll.u32 %v914, 16
      %v1199 = vrot.slane %v1197, 1
      %v1200 = vsel %vm307, %v1196, %v1199
      %v1201 = vshrl.u32 %v914, 16
      %v1203 = vor.u32 %v1201, %v1199
      %v1204 = vshll.u32 %v915, 16
      %v1206 = vrot.slane %v1204, 1
      %v1207 = vsel %vm307, %v1203, %v1206
      %v1208 = vshrl.u32 %v915, 16
      %v1210 = vor.u32 %v1208, %v1206
      %v1211 = vshll.u32 %v916, 16
      %v1213 = vrot.slane %v1211, 1
      %v1214 = vsel %vm307, %v1210, %v1213
      %v1215 = vshrl.u32 %v916, 16
      %v1217 = vor.u32 %v1215, %v1213
      %v1218 = vshll.u32 %v917, 16
      %v1220 = vrot.slane %v1218, 1
      %v1221 = vsel %vm307, %v1217, %v1220
      %v1222 = vshrl.u32 %v917, 16
      %v1224 = vor.u32 %v1222, %v1220
      %v1225 = vshll.u32 %v918, 16
      %v1227 = vrot.slane %v1225, 1
      %v1228 = vsel %vm307, %v1224, %v1227
      %v1229 = vshrl.u32 %v918, 16
      %v1231 = vor.u32 %v1229, %v1227
      %v1232 = vshll.u32 %v919, 16
      %v1234 = vrot.slane %v1232, 1
      %v1235 = vsel %vm307, %v1231, %v1234
      %v1236 = vshrl.u32 %v919, 16
      %v1238 = vor.u32 %v1236, %v1234
      %v1239 = vshll.u32 %v920, 16
      %v1241 = vrot.slane %v1239, 1
      %v1242 = vsel %vm307, %v1238, %v1241
      %v1243 = vshrl.u32 %v920, 16
      %v1245 = vor.u32 %v1243, %v1241
      %v1246 = vshll.u32 %v921, 16
      %v1248 = vrot.slane %v1246, 1
      %v1249 = vsel %vm307, %v1245, %v1248
      %v1250 = vshrl.u32 %v921, 16
      %v1252 = vor.u32 %v1250, %v1248
      %v1253 = vshll.u32 %v922, 16
      %v1255 = vrot.slane %v1253, 1
      %v1256 = vsel %vm307, %v1252, %v1255
      %v1257 = vshrl.u32 %v922, 16
      %v1259 = vor.u32 %v1257, %v1255
      %v1261 = vsel %vm427, %v1165, 0
      %v1264 = vsel %vm427, %v1172, 0
      %v1267 = vsel %vm427, %v1179, 0
      %v1270 = vsel %vm427, %v1186, 0
      %v1273 = vsel %vm427, %v1193, 0
      %v1276 = vsel %vm427, %v1200, 0
      %v1279 = vsel %vm427, %v1207, 0
      %v1282 = vsel %vm427, %v1214, 0
      %v1285 = vsel %vm427, %v1221, 0
      %v1288 = vsel %vm427, %v1228, 0
      %v1291 = vsel %vm427, %v1235, 0
      %v1294 = vsel %vm427, %v1242, 0
      %v1297 = vsel %vm427, %v1249, 0
      %v1300 = vsel %vm427, %v1256, 0
      %v1303 = vsel %vm427, %v1259, 0
      %v1306 = vsel %vm473, %v1155, 0
      %1308 = vmatprep.subr.bf16.mxu0 0
      %1309 = vmatpush1.bf16.msra.mxu0 %v1306
      %1310 = vmatprep.subr.bf16.mxu0 0
      %1311 = vmatpush1.bf16.msra.mxu0 0
      %1312 = vmatprep.subr.bf16.mxu0 0
      %1313 = vmatpush1.bf16.msra.mxu0 0
      %1314 = vmatprep.subr.bf16.mxu0 0
      %1315 = vmatpush1.bf16.msra.mxu0 0
      %1316 = vmatprep.subr.bf16.mxu0 0
      %1317 = vmatpush1.bf16.msra.mxu0 0
      %1318 = vmatprep.subr.bf16.mxu0 0
      %1319 = vmatpush1.bf16.msra.mxu0 0
      %1320 = vmatprep.subr.bf16.mxu0 0
      %1321 = vmatpush1.bf16.msra.mxu0 0
      %1322 = vmatprep.subr.bf16.mxu0 0
      %1323 = vmatpush1.bf16.msra.mxu0 0
      %1324 = vmatprep.subr.bf16.mxu0 0
      %1325 = vmatpush1.bf16.msra.mxu0 0
      %1326 = vmatprep.subr.bf16.mxu0 0
      %1327 = vmatpush1.bf16.msra.mxu0 0
      %1328 = vmatprep.subr.bf16.mxu0 0
      %1329 = vmatpush1.bf16.msra.mxu0 0
      %1330 = vmatprep.subr.bf16.mxu0 0
      %1331 = vmatpush1.bf16.msra.mxu0 0
      %1332 = vmatprep.subr.bf16.mxu0 0
      %1333 = vmatpush1.bf16.msra.mxu0 0
      %1334 = vmatprep.subr.bf16.mxu0 0
      %1335 = vmatpush1.bf16.msra.mxu0 0
      %1336 = vmatprep.subr.bf16.mxu0 0
      %1337 = vmatpush1.bf16.msra.mxu0 0
      %1338 = vmatprep.subr.bf16.mxu0 0
      %1339 = vmatpush1.bf16.msra.mxu0 0
      %1340 = vmatprep.mubr.bf16.mxu0 0
      %1341 = vmatmul.mubr.bf16.gmra.mrb[0].mxu0 %v1261
      %v1342 = vpop.f32.mrb[0].mxu0
      %v1343 = vadd.f32 0.0, %v1342
      %v1344 = vpop.f32.mrb[0].mxu0
      %v1345 = vpop.f32.mrb[0].mxu0
      %v1346 = vadd.f32 0.0, %v1345
      %v1347 = vpop.f32.mrb[0].mxu0
      %1348 = vmatprep.mubr.bf16.mxu0 0
      %1349 = vmatmul.mubr.bf16.gmra.mrb[0].mxu0 %v1264
      %v1350 = vpop.f32.mrb[0].mxu0
      %v1351 = vadd.f32 0.0, %v1350
      %v1352 = vpop.f32.mrb[0].mxu0
      %v1353 = vpop.f32.mrb[0].mxu0
      %v1354 = vadd.f32 0.0, %v1353
      %v1355 = vpop.f32.mrb[0].mxu0
      %1356 = vmatprep.mubr.bf16.mxu0 0
      %1357 = vmatmul.mubr.bf16.gmra.mrb[0].mxu0 %v1267
      %v1358 = vpop.f32.mrb[0].mxu0
      %v1359 = vadd.f32 0.0, %v1358
      %v1360 = vpop.f32.mrb[0].mxu0
      %v1361 = vpop.f32.mrb[0].mxu0
      %v1362 = vadd.f32 0.0, %v1361
      %v1363 = vpop.f32.mrb[0].mxu0
      %1364 = vmatprep.mubr.bf16.mxu0 0
      %1365 = vmatmul.mubr.bf16.gmra.mrb[0].mxu0 %v1270
      %v1366 = vpop.f32.mrb[0].mxu0
      %v1367 = vadd.f32 0.0, %v1366
      %v1368 = vpop.f32.mrb[0].mxu0
      %v1369 = vpop.f32.mrb[0].mxu0
      %v1370 = vadd.f32 0.0, %v1369
      %v1371 = vpop.f32.mrb[0].mxu0
      %1372 = vmatprep.mubr.bf16.mxu0 0
      %1373 = vmatmul.mubr.bf16.gmra.mrb[0].mxu0 %v1273
      %v1374 = vpop.f32.mrb[0].mxu0
      %v1375 = vadd.f32 0.0, %v1374
      %v1376 = vpop.f32.mrb[0].mxu0
      %v1377 = vpop.f32.mrb[0].mxu0
      %v1378 = vadd.f32 0.0, %v1377
      %v1379 = vpop.f32.mrb[0].mxu0
      %1380 = vmatprep.mubr.bf16.mxu0 0
      %1381 = vmatmul.mubr.bf16.gmra.mrb[0].mxu0 %v1276
      %v1382 = vpop.f32.mrb[0].mxu0
      %v1383 = vadd.f32 0.0, %v1382
      %v1384 = vpop.f32.mrb[0].mxu0
      %v1385 = vpop.f32.mrb[0].mxu0
      %v1386 = vadd.f32 0.0, %v1385
      %v1387 = vpop.f32.mrb[0].mxu0
      %1388 = vmatprep.mubr.bf16.mxu0 0
      %1389 = vmatmul.mubr.bf16.gmra.mrb[0].mxu0 %v1279
      %v1390 = vpop.f32.mrb[0].mxu0
      %v1391 = vadd.f32 0.0, %v1390
      %v1392 = vpop.f32.mrb[0].mxu0
      %v1393 = vpop.f32.mrb[0].mxu0
      %v1394 = vadd.f32 0.0, %v1393
      %v1395 = vpop.f32.mrb[0].mxu0
      %1396 = vmatprep.mubr.bf16.mxu0 0
      %1397 = vmatmul.mubr.bf16.gmra.mrb[0].mxu0 %v1282
      %v1398 = vpop.f32.mrb[0].mxu0
      %v1399 = vadd.f32 0.0, %v1398
      %v1400 = vpop.f32.mrb[0].mxu0
      %v1401 = vpop.f32.mrb[0].mxu0
      %v1402 = vadd.f32 0.0, %v1401
      %v1403 = vpop.f32.mrb[0].mxu0
      %1404 = vmatprep.mubr.bf16.mxu0 0
      %1405 = vmatmul.mubr.bf16.gmra.mrb[0].mxu0 %v1285
      %v1406 = vpop.f32.mrb[0].mxu0
      %v1407 = vadd.f32 0.0, %v1406
      %v1408 = vpop.f32.mrb[0].mxu0
      %v1409 = vpop.f32.mrb[0].mxu0
      %v1410 = vadd.f32 0.0, %v1409
      %v1411 = vpop.f32.mrb[0].mxu0
      %1412 = vmatprep.mubr.bf16.mxu0 0
      %1413 = vmatmul.mubr.bf16.gmra.mrb[0].mxu0 %v1288
      %v1414 = vpop.f32.mrb[0].mxu0
      %v1415 = vadd.f32 0.0, %v1414
      %v1416 = vpop.f32.mrb[0].mxu0
      %v1417 = vpop.f32.mrb[0].mxu0
      %v1418 = vadd.f32 0.0, %v1417
      %v1419 = vpop.f32.mrb[0].mxu0
      %1420 = vmatprep.mubr.bf16.mxu0 0
      %1421 = vmatmul.mubr.bf16.gmra.mrb[0].mxu0 %v1291
      %v1422 = vpop.f32.mrb[0].mxu0
      %v1423 = vadd.f32 0.0, %v1422
      %v1424 = vpop.f32.mrb[0].mxu0
      %v1425 = vpop.f32.mrb[0].mxu0
      %v1426 = vadd.f32 0.0, %v1425
      %v1427 = vpop.f32.mrb[0].mxu0
      %1428 = vmatprep.mubr.bf16.mxu0 0
      %1429 = vmatmul.mubr.bf16.gmra.mrb[0].mxu0 %v1294
      %v1430 = vpop.f32.mrb[0].mxu0
      %v1431 = vadd.f32 0.0, %v1430
      %v1432 = vpop.f32.mrb[0].mxu0
      %v1433 = vpop.f32.mrb[0].mxu0
      %v1434 = vadd.f32 0.0, %v1433
      %v1435 = vpop.f32.mrb[0].mxu0
      %1436 = vmatprep.mubr.bf16.mxu0 0
      %1437 = vmatmul.mubr.bf16.gmra.mrb[0].mxu0 %v1297
      %v1438 = vpop.f32.mrb[0].mxu0
      %v1439 = vadd.f32 0.0, %v1438
      %v1440 = vpop.f32.mrb[0].mxu0
      %v1441 = vpop.f32.mrb[0].mxu0
      %v1442 = vadd.f32 0.0, %v1441
      %v1443 = vpop.f32.mrb[0].mxu0
      %1444 = vmatprep.mubr.bf16.mxu0 0
      %1445 = vmatmul.mubr.bf16.gmra.mrb[0].mxu0 %v1300
      %v1446 = vpop.f32.mrb[0].mxu0
      %v1447 = vadd.f32 0.0, %v1446
      %v1448 = vpop.f32.mrb[0].mxu0
      %v1449 = vpop.f32.mrb[0].mxu0
      %v1450 = vadd.f32 0.0, %v1449
      %v1451 = vpop.f32.mrb[0].mxu0
      %1452 = vmatprep.mubr.bf16.mxu0 0
      %1453 = vmatmul.mubr.bf16.gmra.mrb[0].mxu0 %v1303
      %v1454 = vpop.f32.mrb[0].mxu0
      %v1455 = vadd.f32 0.0, %v1454
      %v1456 = vpop.f32.mrb[0].mxu0
      %v1457 = vpop.f32.mrb[0].mxu0
      %v1458 = vadd.f32 0.0, %v1457
      %v1459 = vpop.f32.mrb[0].mxu0
      %1460 = vdwg.mxu0
      %v1461 = vadd.f32 %v1124, %v1343
      %v1462 = vadd.f32 %v1125, %v1346
      %v1463 = vadd.f32 %v1126, %v1351
      %v1464 = vadd.f32 %v1127, %v1354
      %v1465 = vadd.f32 %v1128, %v1359
      %v1466 = vadd.f32 %v1129, %v1362
      %v1467 = vadd.f32 %v1130, %v1367
      %v1468 = vadd.f32 %v1131, %v1370
      %v1469 = vadd.f32 %v1132, %v1375
      %v1470 = vadd.f32 %v1133, %v1378
      %v1471 = vadd.f32 %v1134, %v1383
      %v1472 = vadd.f32 %v1135, %v1386
      %v1473 = vadd.f32 %v1136, %v1391
      %v1474 = vadd.f32 %v1137, %v1394
      %v1475 = vadd.f32 %v1138, %v1399
      %v1476 = vadd.f32 %v1139, %v1402
      %v1477 = vadd.f32 %v1140, %v1407
      %v1478 = vadd.f32 %v1141, %v1410
      %v1479 = vadd.f32 %v1142, %v1415
      %v1480 = vadd.f32 %v1143, %v1418
      %v1481 = vadd.f32 %v1144, %v1423
      %v1482 = vadd.f32 %v1145, %v1426
      %v1483 = vadd.f32 %v1146, %v1431
      %v1484 = vadd.f32 %v1147, %v1434
      %v1485 = vadd.f32 %v1148, %v1439
      %v1486 = vadd.f32 %v1149, %v1442
      %v1487 = vadd.f32 %v1150, %v1447
      %v1488 = vadd.f32 %v1151, %v1450
      %v1489 = vadd.f32 %v1152, %v1455
      %v1490 = vadd.f32 %v1153, %v1458
      %v1491 = vld [vmem:[%s2] sm:$0x1]
      %v1493 = vlaneseq
      %v1494 = vshrl.u32 %v1493, 7
      %v1495 = vsub.s32 0, %v1494
      %v1496 = vrot.slane %v1491, %v1495
      %v1498 = vadd.f32 %v1461, %v1496
      %v1499 = vadd.f32 %v1462, %v1496
      %v1500 = vadd.f32 %v1463, %v1496
      %v1501 = vadd.f32 %v1464, %v1496
      %v1502 = vadd.f32 %v1465, %v1496
      %v1503 = vadd.f32 %v1466, %v1496
      %v1504 = vadd.f32 %v1467, %v1496
      %v1505 = vadd.f32 %v1468, %v1496
      %v1506 = vadd.f32 %v1469, %v1496
      %v1507 = vadd.f32 %v1470, %v1496
      %v1508 = vadd.f32 %v1471, %v1496
      %v1509 = vadd.f32 %v1472, %v1496
      %v1510 = vadd.f32 %v1473, %v1496
      %v1511 = vadd.f32 %v1474, %v1496
      %v1512 = vadd.f32 %v1475, %v1496
      %v1513 = vadd.f32 %v1476, %v1496
      %v1514 = vadd.f32 %v1477, %v1496
      %v1515 = vadd.f32 %v1478, %v1496
      %v1516 = vadd.f32 %v1479, %v1496
      %v1517 = vadd.f32 %v1480, %v1496
      %v1518 = vadd.f32 %v1481, %v1496
      %v1519 = vadd.f32 %v1482, %v1496
      %v1520 = vadd.f32 %v1483, %v1496
      %v1521 = vadd.f32 %v1484, %v1496
      %v1522 = vadd.f32 %v1485, %v1496
      %v1523 = vadd.f32 %v1486, %v1496
      %v1524 = vadd.f32 %v1487, %v1496
      %v1525 = vadd.f32 %v1488, %v1496
      %v1526 = vadd.f32 %v1489, %v1496
      %v1527 = vadd.f32 %v1490, %v1496
      %v1528 = vmax.f32 %v1498, 0.0
      %v1529 = vmax.f32 %v1499, 0.0
      %v1530 = vmax.f32 %v1500, 0.0
      %v1531 = vmax.f32 %v1501, 0.0
      %v1532 = vmax.f32 %v1502, 0.0
      %v1533 = vmax.f32 %v1503, 0.0
      %v1534 = vmax.f32 %v1504, 0.0
      %v1535 = vmax.f32 %v1505, 0.0
      %v1536 = vmax.f32 %v1506, 0.0
      %v1537 = vmax.f32 %v1507, 0.0
      %v1538 = vmax.f32 %v1508, 0.0
      %v1539 = vmax.f32 %v1509, 0.0
      %v1540 = vmax.f32 %v1510, 0.0
      %v1541 = vmax.f32 %v1511, 0.0
      %v1542 = vmax.f32 %v1512, 0.0
      %v1543 = vmax.f32 %v1513, 0.0
      %v1544 = vmax.f32 %v1514, 0.0
      %v1545 = vmax.f32 %v1515, 0.0
      %v1546 = vmax.f32 %v1516, 0.0
      %v1547 = vmax.f32 %v1517, 0.0
      %v1548 = vmax.f32 %v1518, 0.0
      %v1549 = vmax.f32 %v1519, 0.0
      %v1550 = vmax.f32 %v1520, 0.0
      %v1551 = vmax.f32 %v1521, 0.0
      %v1552 = vmax.f32 %v1522, 0.0
      %v1553 = vmax.f32 %v1523, 0.0
      %v1554 = vmax.f32 %v1524, 0.0
      %v1555 = vmax.f32 %v1525, 0.0
      %v1556 = vmax.f32 %v1526, 0.0
      %v1557 = vmax.f32 %v1527, 0.0
      %v1558 = vld [vmem:[%s3] sm:$0x1]
      %v1560 = vlaneseq
      %v1561 = vshrl.u32 %v1560, 7
      %v1562 = vsub.s32 0, %v1561
      %v1563 = vrot.slane %v1558, %v1562
      %v1565 = vmul.f32 %v1528, %v1563
      %v1566 = vmul.f32 %v1529, %v1563
      %v1567 = vmul.f32 %v1530, %v1563
      %v1568 = vmul.f32 %v1531, %v1563
      %v1569 = vmul.f32 %v1532, %v1563
      %v1570 = vmul.f32 %v1533, %v1563
      %v1571 = vmul.f32 %v1534, %v1563
      %v1572 = vmul.f32 %v1535, %v1563
      %v1573 = vmul.f32 %v1536, %v1563
      %v1574 = vmul.f32 %v1537, %v1563
      %v1575 = vmul.f32 %v1538, %v1563
      %v1576 = vmul.f32 %v1539, %v1563
      %v1577 = vmul.f32 %v1540, %v1563
      %v1578 = vmul.f32 %v1541, %v1563
      %v1579 = vmul.f32 %v1542, %v1563
      %v1580 = vmul.f32 %v1543, %v1563
      %v1581 = vmul.f32 %v1544, %v1563
      %v1582 = vmul.f32 %v1545, %v1563
      %v1583 = vmul.f32 %v1546, %v1563
      %v1584 = vmul.f32 %v1547, %v1563
      %v1585 = vmul.f32 %v1548, %v1563
      %v1586 = vmul.f32 %v1549, %v1563
      %v1587 = vmul.f32 %v1550, %v1563
      %v1588 = vmul.f32 %v1551, %v1563
      %v1589 = vmul.f32 %v1552, %v1563
      %v1590 = vmul.f32 %v1553, %v1563
      %v1591 = vmul.f32 %v1554, %v1563
      %v1592 = vmul.f32 %v1555, %v1563
      %v1593 = vmul.f32 %v1556, %v1563
      %v1594 = vmul.f32 %v1557, %v1563
      %1595 = vst [vmem:[#allocation2] sm:$0xff] %v1565
      %1596 = vst [vmem:[#allocation2 + $0x8] sm:$0xff] %v1566
      %1597 = vst [vmem:[#allocation2 + $0x10] sm:$0xff] %v1567
      %1598 = vst [vmem:[#allocation2 + $0x18] sm:$0xff] %v1568
      %1599 = vst [vmem:[#allocation2 + $0x20] sm:$0xff] %v1569
      %1600 = vst [vmem:[#allocation2 + $0x28] sm:$0xff] %v1570
      %1601 = vst [vmem:[#allocation2 + $0x30] sm:$0xff] %v1571
      %1602 = vst [vmem:[#allocation2 + $0x38] sm:$0xff] %v1572
      %1603 = vst [vmem:[#allocation2 + $0x40] sm:$0xff] %v1573
      %1604 = vst [vmem:[#allocation2 + $0x48] sm:$0xff] %v1574
      %1605 = vst [vmem:[#allocation2 + $0x50] sm:$0xff] %v1575
      %1606 = vst [vmem:[#allocation2 + $0x58] sm:$0xff] %v1576
      %1607 = vst [vmem:[#allocation2 + $0x60] sm:$0xff] %v1577
      %1608 = vst [vmem:[#allocation2 + $0x68] sm:$0xff] %v1578
      %1609 = vst [vmem:[#allocation2 + $0x70] sm:$0xff] %v1579
      %1610 = vst [vmem:[#allocation2 + $0x78] sm:$0xff] %v1580
      %1611 = vst [vmem:[#allocation2 + $0x80] sm:$0xff] %v1581
      %1612 = vst [vmem:[#allocation2 + $0x88] sm:$0xff] %v1582
      %1613 = vst [vmem:[#allocation2 + $0x90] sm:$0xff] %v1583
      %1614 = vst [vmem:[#allocation2 + $0x98] sm:$0xff] %v1584
      %1615 = vst [vmem:[#allocation2 + $0xa0] sm:$0xff] %v1585
      %1616 = vst [vmem:[#allocation2 + $0xa8] sm:$0xff] %v1586
      %1617 = vst [vmem:[#allocation2 + $0xb0] sm:$0xff] %v1587
      %1618 = vst [vmem:[#allocation2 + $0xb8] sm:$0xff] %v1588
      %1619 = vst [vmem:[#allocation2 + $0xc0] sm:$0xff] %v1589
      %1620 = vst [vmem:[#allocation2 + $0xc8] sm:$0xff] %v1590
      %1621 = vst [vmem:[#allocation2 + $0xd0] sm:$0xff] %v1591
      %1622 = vst [vmem:[#allocation2 + $0xd8] sm:$0xff] %v1592
      %1623 = vst [vmem:[#allocation2 + $0xe0] sm:$0xff] %v1593
      %1624 = vst [vmem:[#allocation2 + $0xe8] sm:$0x7f] %v1594
      %v1625 = vld [vmem:[#allocation2] sm:$0xff]
      %v1626 = vld [vmem:[#allocation2 + $0x8] sm:$0x3f]
      %v1627 = vld [vmem:[#allocation2 + $0x10] sm:$0xff]
      %v1628 = vld [vmem:[#allocation2 + $0x18] sm:$0x3f]
      %v1629 = vmax.f32 %v1625, %v1627
      %v1630 = vmax.f32 %v1626, %v1628
      %1631 = vst [vmem:[#allocation3] sm:$0xff] %v1629
      %1632 = vst [vmem:[#allocation3 + $0x8] sm:$0x3f] %v1630
      %v1633 = vld [vmem:[#allocation2 + $0x20] sm:$0xff]
      %v1634 = vld [vmem:[#allocation2 + $0x28] sm:$0x3f]
      %v1635 = vld [vmem:[#allocation2 + $0x30] sm:$0xff]
      %v1636 = vld [vmem:[#allocation2 + $0x38] sm:$0x3f]
      %v1637 = vmax.f32 %v1633, %v1635
      %v1638 = vmax.f32 %v1634, %v1636
      %1639 = vst [vmem:[#allocation3 + $0xe] sm:$0xff] %v1637
      %1640 = vst [vmem:[#allocation3 + $0x16] sm:$0x3f] %v1638
      %v1641 = vld [vmem:[#allocation2 + $0x40] sm:$0xff]
      %v1642 = vld [vmem:[#allocation2 + $0x48] sm:$0x3f]
      %v1643 = vld [vmem:[#allocation2 + $0x50] sm:$0xff]
      %v1644 = vld [vmem:[#allocation2 + $0x58] sm:$0x3f]
      %v1645 = vmax.f32 %v1641, %v1643
      %v1646 = vmax.f32 %v1642, %v1644
      %1647 = vst [vmem:[#allocation3 + $0x1c] sm:$0xff] %v1645
      %1648 = vst [vmem:[#allocation3 + $0x24] sm:$0x3f] %v1646
      %v1649 = vld [vmem:[#allocation2 + $0x60] sm:$0xff]
      %v1650 = vld [vmem:[#allocation2 + $0x68] sm:$0x3f]
      %v1651 = vld [vmem:[#allocation2 + $0x70] sm:$0xff]
      %v1652 = vld [vmem:[#allocation2 + $0x78] sm:$0x3f]
      %v1653 = vmax.f32 %v1649, %v1651
      %v1654 = vmax.f32 %v1650, %v1652
      %1655 = vst [vmem:[#allocation3 + $0x2a] sm:$0xff] %v1653
      %1656 = vst [vmem:[#allocation3 + $0x32] sm:$0x3f] %v1654
      %v1657 = vld [vmem:[#allocation2 + $0x80] sm:$0xff]
      %v1658 = vld [vmem:[#allocation2 + $0x88] sm:$0x3f]
      %v1659 = vld [vmem:[#allocation2 + $0x90] sm:$0xff]
      %v1660 = vld [vmem:[#allocation2 + $0x98] sm:$0x3f]
      %v1661 = vmax.f32 %v1657, %v1659
      %v1662 = vmax.f32 %v1658, %v1660
      %1663 = vst [vmem:[#allocation3 + $0x38] sm:$0xff] %v1661
      %1664 = vst [vmem:[#allocation3 + $0x40] sm:$0x3f] %v1662
      %v1665 = vld [vmem:[#allocation2 + $0xa0] sm:$0xff]
      %v1666 = vld [vmem:[#allocation2 + $0xa8] sm:$0x3f]
      %v1667 = vld [vmem:[#allocation2 + $0xb0] sm:$0xff]
      %v1668 = vld [vmem:[#allocation2 + $0xb8] sm:$0x3f]
      %v1669 = vmax.f32 %v1665, %v1667
      %v1670 = vmax.f32 %v1666, %v1668
      %1671 = vst [vmem:[#allocation3 + $0x46] sm:$0xff] %v1669
      %1672 = vst [vmem:[#allocation3 + $0x4e] sm:$0x3f] %v1670
      %v1673 = vld [vmem:[#allocation2 + $0xc0] sm:$0xff]
      %v1674 = vld [vmem:[#allocation2 + $0xc8] sm:$0x3f]
      %v1675 = vld [vmem:[#allocation2 + $0xd0] sm:$0xff]
      %v1676 = vld [vmem:[#allocation2 + $0xd8] sm:$0x3f]
      %v1677 = vmax.f32 %v1673, %v1675
      %v1678 = vmax.f32 %v1674, %v1676
      %1679 = vst [vmem:[#allocation3 + $0x54] sm:$0xff] %v1677
      %1680 = vst [vmem:[#allocation3 + $0x5c] sm:$0x3f] %v1678
      %v1681 = vld [vmem:[#allocation3] ss:$2 sm:$0xff]
      %s1682 = scalar_lea.vmem [#allocation3], 16
      %v1683 = vld [vmem:[%s1682] ss:$2 sm:$0xff]
      %s1684 = scalar_lea.vmem [#allocation3], 32
      %v1685 = vld [vmem:[%s1684] ss:$2 sm:$0xff]
      %s1686 = scalar_lea.vmem [#allocation3], 48
      %v1687 = vld [vmem:[%s1686] ss:$2 sm:$0xff]
      %s1688 = scalar_lea.vmem [#allocation3], 64
      %v1689 = vld [vmem:[%s1688] ss:$2 sm:$0xff]
      %s1690 = scalar_lea.vmem [#allocation3], 80
      %v1691 = vld [vmem:[%s1690] ss:$2 sm:$0xff]
      %s1692 = scalar_lea.vmem [#allocation3], 96
      %v1693 = vld [vmem:[%s1692] ss:$2 sm:$0x1]
      %s1694 = scalar_lea.vmem [#allocation3], 1
      %v1695 = vld [vmem:[%s1694] ss:$2 sm:$0xff]
      %s1696 = scalar_lea.vmem [#allocation3], 17
      %v1697 = vld [vmem:[%s1696] ss:$2 sm:$0xff]
      %s1698 = scalar_lea.vmem [#allocation3], 33
      %v1699 = vld [vmem:[%s1698] ss:$2 sm:$0xff]
      %s1700 = scalar_lea.vmem [#allocation3], 49
      %v1701 = vld [vmem:[%s1700] ss:$2 sm:$0xff]
      %s1702 = scalar_lea.vmem [#allocation3], 65
      %v1703 = vld [vmem:[%s1702] ss:$2 sm:$0xff]
      %s1704 = scalar_lea.vmem [#allocation3], 81
      %v1705 = vld [vmem:[%s1704] ss:$2 sm:$0xff]
      %s1706 = scalar_lea.vmem [#allocation3], 97
      %v1707 = vld [vmem:[%s1706] ss:$2 sm:$0x1]
      %v1708 = vmax.f32 %v1681, %v1695
      %v1709 = vmax.f32 %v1683, %v1697
      %v1710 = vmax.f32 %v1685, %v1699
      %v1711 = vmax.f32 %v1687, %v1701
      %v1712 = vmax.f32 %v1689, %v1703
      %v1713 = vmax.f32 %v1691, %v1705
      %v1714 = vmax.f32 %v1693, %v1707
      %v1715 = vpack.c.bf16 %v1709, %v1708
      %v1716 = vpack.c.bf16 %v1711, %v1710
      %v1717 = vpack.c.bf16 %v1713, %v1712
      %v1718 = vpack.c.bf16 %v1714, %v1714
      %v1723 = vunpack.c.l.b16 %v1715
      %v1724 = vunpack.c.h.b16 %v1715
      %v1725 = vunpack.c.l.b16 %v1716
      %v1726 = vunpack.c.h.b16 %v1716
      %v1727 = vunpack.c.l.b16 %v1717
      %v1728 = vunpack.c.h.b16 %v1717
      %v1729 = vunpack.c.l.b16 %v1718
      %v1730 = vpack.c.b16 %v1723, %v1723
      %v1731 = vpack.c.b16 %v1724, %v1724
      %v1732 = vpack.c.b16 %v1725, %v1725
      %v1733 = vpack.c.b16 %v1726, %v1726
      %v1734 = vpack.c.b16 %v1727, %v1727
      %v1735 = vpack.c.b16 %v1728, %v1728
      %v1736 = vpack.c.b16 %v1729, %v1729
      %1744 = vst [vmem:[%s197] sm:$0xf] %v1730
      %1745 = vst [vmem:[%s197 + $0x4] sm:$0xf] %v1731
      %1746 = vst [vmem:[%s197 + $0x8] sm:$0xf] %v1732
      %1747 = vst [vmem:[%s197 + $0xc] sm:$0xf] %v1733
      %1748 = vst [vmem:[%s197 + $0x10] sm:$0xf] %v1734
      %1749 = vst [vmem:[%s197 + $0x14] sm:$0xf] %v1735
      %vm1750 = vcmask 1040384
      %vm1751 = vsmask.f32 256
      %vm1752 = vmand %vm1750, %vm1751
      %v1753 = vld [vmem:[%s197 + $0x18] sm:$0x1]
      %v1754 = vsel %vm1752, %v1736, %v1753
      %1755 = vst [vmem:[%s197 + $0x18] sm:$0x1] %v1754
      %p1756 = scmp.lt.s32.totalorder %s15, 1
      %s1757 = scalar_select %p1756, %s15, 1
      %s1758 = smul.addr %s1757, 7
      %s1759 = smul.addr %s1758, 4
      %s1760 = scalar_lea.vmem %s4, %s1759
      // Predicated region
      $region37: #{tpu_custom_call.1} parent=35 // pred_check
        %p1761 = pneg %p122
      $region38: #{tpu_custom_call.1} parent=35 // pred_check_branch
        %1763 = sbr.rel (%p1761) target = $region40
      $region39: #{tpu_custom_call.1} parent=35 // pred_region
        _
      $region40: #{tpu_custom_call.1} parent=35 // pred_fallthru
        _
    $region36: #{tpu_custom_call.1} parent=5 // pred_fallthru
      _
    %p1764 = scmp.le.s32.totalorder 2, %s10
    // Predicated region
    $region41: #{tpu_custom_call.1} parent=5 // pred_check
      %p1765 = pneg %p1764
    $region42: #{tpu_custom_call.1} parent=5 // pred_check_branch
      %1767 = sbr.rel (%p1765) target = $region44
    $region43: #{tpu_custom_call.1} parent=5 // pred_region
      %s1768 = ssub.s32 %s10, 2
      // Predicated region
      $region45: #{tpu_custom_call.1} parent=43 // pred_check
        %p1769 = pneg %p128
      $region46: #{tpu_custom_call.1} parent=43 // pred_check_branch
        %1771 = sbr.rel (%p1769) target = $region48
      $region47: #{tpu_custom_call.1} parent=43 // pred_region
        %p1772 = scmp.lt.s32.totalorder %s16, 1
        %s1773 = scalar_select %p1772, %s16, 1
        %s1774 = smul.addr %s1773, 7
        %s1775 = smul.addr %s1774, 4
        %s1776 = scalar_lea.vmem %s4, %s1775
      $region48: #{tpu_custom_call.1} parent=43 // pred_fallthru
        _
    $region44: #{tpu_custom_call.1} parent=5 // pred_fallthru
      _
  $region6: #{tpu_custom_call.1} parent=0 // loop_footer
    %s14 = sadd.s32 1, %s10
  $region7: #{tpu_custom_call.1} parent=0 // loop_footer_branch
    %9 = sbr.rel target = $region3
  $region8: #{tpu_custom_call.1} parent=0 // loop_exit
    _

</llo_original>
